<compile_context>
chip_gen: v5e
topology: v5e:2x2
jax: 0.10.0
libtpu: 0.0.40
codegen_flags: <defaults>
</compile_context>

<pallas_src>
import jax
import jax.numpy as jnp
from jax.experimental import pallas as pl
from jax.experimental.pallas import tpu as pltpu

# ----------------------------- configuration ------------------------------
T = 6            # number of graph snapshots (sequence length)
V = 16           # nodes per snapshot
C_IN = 4         # in_channels
H = 32           # hidden_channels
N_STATE = 8      # d_state
C_OUT = 4        # out_channels
NUM_LAYERS = 2
HN = H * N_STATE          # 256
TV = T * V                # 96

# packed-slab layout constants (all row offsets 8-aligned)
CIN_PAD = 32              # layer-0 input channels zero-padded to H
ROW_BIAS = 2 * CIN_PAD    # row of per-layer bias / A rows in the weight slabs
ROWS_W = 80               # rows in the (.,288)/(.,256) weight slabs
SMALL_ROWS = 64           # rows in the width-32 "small" slab
R_PMW = 0                 # premix conv weights (3 rows)
R_PMB = 4                 # premix conv bias
R_MLPW = 8                # final MLP weight (H rows, cols 0:C_OUT valid)
R_MLPB = 40               # final MLP bias
R_BCM = 48                # channel-mixer bias, layer i at R_BCM + 8*i


# ------------------------------- fused kernel ------------------------------
def fused_forward_kernel(x_ref, adj_ref, w288_ref, w256_ref, wcm_ref, small_ref,
                         o_ref, s_scr):
    """Entire DiagonalSSM forward, VMEM-resident, no grid."""
    x = x_ref[...]                                   # (T*V, 32), cols C_IN: zero
    adj = adj_ref[...]                               # (T*V, T*V) block-diag mean-agg
    small = small_ref[...]                           # (64, 32) misc small params

    # ---- pre token mixer: depthwise conv1d over time (k=3, zero pad).
    # Computed as a value on the whole slab via two sublane shifts (no scratch).
    zero_blk = jnp.zeros((V, CIN_PAD), jnp.float32)
    x_prev = jnp.concatenate([zero_blk, x[:TV - V, :]], axis=0)   # x[t-1]
    x_next = jnp.concatenate([x[V:, :], zero_blk], axis=0)        # x[t+1]
    h = (x_prev * small[R_PMW:R_PMW + 1, :]
         + x * small[R_PMW + 1:R_PMW + 2, :]
         + x_next * small[R_PMW + 2:R_PMW + 3, :]
         + small[R_PMB:R_PMB + 1, :])                             # (T*V, 32)

    for layer in range(NUM_LAYERS):                  # static unroll, identical shapes
        r0 = layer * CIN_PAD
        rb = ROW_BIAS + 8 * layer
        wf = w288_ref[pl.ds(r0, CIN_PAD), :]         # (32, HN+H)  [self(B-folded)|res]
        bf = w288_ref[pl.ds(rb, 1), :]               # (1, HN+H)   [sage_b*B | res_b]
        wn = w256_ref[pl.ds(r0, CIN_PAD), :]         # (32, HN)    w_nbr with B folded
        a = w256_ref[pl.ds(rb, 1), :]                # (1, HN)     A, H-major flat
        wcm = wcm_ref[pl.ds(layer * HN, HN), :]      # (HN, H)     bf16 channel mixer
        bcm = small[R_BCM + 8 * layer:R_BCM + 8 * layer + 1, :]   # (1, H)

        # One MXU pass over all T*V rows covers both the SAGE self path (with the
        # B gate already folded in) and the residual Linear.
        rs = jnp.dot(h, wf, preferred_element_type=jnp.float32) + bf  # (T*V, HN+H)
        # mean-neighbor aggregation for ALL snapshots in one matmul
        agg = jnp.dot(adj, h, preferred_element_type=jnp.float32)     # (T*V, 32)
        # u = (x@w_self + agg@w_nbr + sage_b) replicated*B, directly:
        u = rs[:, :HN] + jnp.dot(agg, wn, preferred_element_type=jnp.float32)
        xsr = rs[:, HN:]                              # residual, off dependent chain

        # diagonal SISO recurrence: pure VPU f32 elementwise, unrolled over T.
        a_b = jnp.broadcast_to(a, (V, HN))            # hoisted out of the loop
        state = jnp.zeros((V, HN), jnp.float32)
        for t in range(T):
            state = a_b * state + u[t * V:(t + 1) * V, :]
            # bf16 cast only at the store / MXU boundary
            s_scr[pl.ds(t * V, V), :] = jnp.maximum(state, 0.0).astype(jnp.bfloat16)

        # channel mixer hoisted out of the scan: one bf16 (T*V,HN)x(HN,H) dot,
        # f32 accumulation.
        y = jnp.dot(s_scr[...], wcm, preferred_element_type=jnp.float32)
        h = y + bcm + xsr                             # (T*V, H)

    # ---- final MLP on the last snapshot only (the only HBM store of the kernel)
    mlpw = small[R_MLPW:R_MLPW + H, :]                # (H, 32), cols C_OUT: zero
    mlpb = small[R_MLPB:R_MLPB + 1, :]                # (1, 32)
    out = jnp.dot(h[(T - 1) * V:, :], mlpw, preferred_element_type=jnp.float32) + mlpb
    o_ref[...] = out.astype(o_ref.dtype)              # (V, 32); wrapper slices :C_OUT


# ------------------------------- wrappers ----------------------------------
def block_diag_adjs(adjs):
    """(T, V, V) per-snapshot mean-agg matrices -> (T*V, T*V) block-diagonal."""
    tt, vv, _ = adjs.shape
    eye_t = jnp.eye(tt, dtype=adjs.dtype)
    return (eye_t[:, None, :, None] * adjs[:, :, None, :]).reshape(tt * vv, tt * vv)


def pack_params(params):
    """One-time host-side parameter repacking into 4 kernel slabs."""
    def fold_b(w, B):
        # out[c, h*N + n] = w[c, h] * B[h, n]   (d_state replication + B gate)
        return (w[:, :, None] * B[None, :, :]).reshape(w.shape[0], HN)

    layers = params["layers"]
    w288 = jnp.zeros((ROWS_W, HN + H), jnp.float32)
    w256 = jnp.zeros((ROWS_W, HN), jnp.float32)
    for i, p in enumerate(layers):
        wf = jnp.concatenate([fold_b(p["w_self"], p["B"]), p["res_w"]], axis=1)
        bf = jnp.concatenate([fold_b(p["sage_b"], p["B"]), p["res_b"]], axis=1)
        wn = fold_b(p["w_nbr"], p["B"])
        a_flat = p["A"].reshape(1, HN)                       # H-major flatten
        cin = wf.shape[0]
        w288 = w288.at[i * CIN_PAD:i * CIN_PAD + cin, :].set(wf)
        w288 = w288.at[ROW_BIAS + 8 * i, :].set(bf[0])
        w256 = w256.at[i * CIN_PAD:i * CIN_PAD + cin, :].set(wn)
        w256 = w256.at[ROW_BIAS + 8 * i, :].set(a_flat[0])

    wcm = jnp.concatenate([layers[0]["wcm"], layers[1]["wcm"]],
                          axis=0).astype(jnp.bfloat16)       # (2*HN, H) bf16

    small = jnp.zeros((SMALL_ROWS, H), jnp.float32)
    small = small.at[R_PMW:R_PMW + 3, :C_IN].set(params["premix_w"])
    small = small.at[R_PMB, :C_IN].set(params["premix_b"][0])
    small = small.at[R_MLPW:R_MLPW + H, :C_OUT].set(params["mlp_w"])
    small = small.at[R_MLPB, :C_OUT].set(params["mlp_b"][0])
    small = small.at[R_BCM, :].set(layers[0]["bcm"][0])
    small = small.at[R_BCM + 8, :].set(layers[1]["bcm"][0])

    return {"w288": w288, "w256": w256, "wcm": wcm, "small": small}


def diagonal_ssm_forward(xs, adjs, packed):
    """xs: (T, V, C_IN) node features; adjs: (T, V, V) mean-agg matrices."""
    tt, vv, cin = xs.shape
    x_pad = jnp.zeros((tt * vv, CIN_PAD), jnp.float32)
    x_pad = x_pad.at[:, :cin].set(xs.reshape(tt * vv, cin))
    adj_bd = block_diag_adjs(adjs)                   # one-time graph preprocessing

    mm_flops = 2 * NUM_LAYERS * (TV * CIN_PAD * (HN + H)   # h @ wf
                                 + TV * TV * CIN_PAD       # adj @ h
                                 + TV * CIN_PAD * HN       # agg @ wn
                                 + TV * HN * H)            # s @ wcm
    mm_flops += 2 * V * H * H                               # final MLP (padded)
    bytes_acc = (4 * (TV * CIN_PAD + TV * TV + ROWS_W * (HN + H)
                      + ROWS_W * HN + SMALL_ROWS * H + V * CIN_PAD)
                 + 2 * (NUM_LAYERS * HN * H))

    out = pl.pallas_call(
        fused_forward_kernel,
        out_shape=jax.ShapeDtypeStruct((vv, CIN_PAD), jnp.float32),
        scratch_shapes=[
            pltpu.VMEM((tt * vv, HN), jnp.bfloat16),   # relu(state) slab (bf16, reused)
        ],
        cost_estimate=pl.CostEstimate(flops=mm_flops, transcendentals=0,
                                      bytes_accessed=bytes_acc),
    )(x_pad, adj_bd, packed["w288"], packed["w256"], packed["wcm"], packed["small"])
    return out[:, :C_OUT]


# --------------------------- pure-JAX reference ----------------------------
def reference_forward(xs, adjs, params):
    w, b = params["premix_w"], params["premix_b"]
    xpad = jnp.pad(xs, ((1, 1), (0, 0), (0, 0)))
    h = (xpad[0:T] * w[0][None, None] + xpad[1:T + 1] * w[1][None, None]
         + xpad[2:T + 2] * w[2][None, None] + b[None])
    for p in params["layers"]:
        xsr = jnp.einsum("tvc,ch->tvh", h, p["res_w"]) + p["res_b"][None]
        agg = jnp.einsum("tvw,twc->tvc", adjs, h)
        hc = (jnp.einsum("tvc,ch->tvh", h, p["w_self"])
              + jnp.einsum("tvc,ch->tvh", agg, p["w_nbr"]) + p["sage_b"][None])
        state = jnp.zeros((V, H, N_STATE), jnp.float32)
        outs = []
        for t in range(T):
            state = p["A"][None] * state + p["B"][None] * hc[t][:, :, None]
            y = (jnp.maximum(state.reshape(V, HN), 0.0) @ p["wcm"]
                 + p["bcm"] + xsr[t])
            outs.append(y)
        h = jnp.stack(outs)
    return h[-1] @ params["mlp_w"] + params["mlp_b"]


# ----------------------------- param / data init ---------------------------
def make_params(key):
    ks = iter(jax.random.split(key, 40))

    def nrm(shape, scale=0.1):
        return scale * jax.random.normal(next(ks), shape, dtype=jnp.float32)

    params = {
        "premix_w": nrm((3, C_IN), 0.5),
        "premix_b": nrm((1, C_IN), 0.1),
        "mlp_w": nrm((H, C_OUT), 0.2),
        "mlp_b": nrm((1, C_OUT), 0.1),
        "layers": [],
    }
    for i in range(NUM_LAYERS):
        cin = C_IN if i == 0 else H
        A = jax.random.uniform(next(ks), (H, N_STATE), jnp.float32, 0.5, 0.95)
        params["layers"].append({
            "res_w": nrm((cin, H), 0.3),
            "res_b": nrm((1, H), 0.1),
            "w_self": nrm((cin, H), 0.3),
            "w_nbr": nrm((cin, H), 0.3),
            "sage_b": nrm((1, H), 0.1),
            "A": A,
            "B": nrm((H, N_STATE), 0.3),
            "wcm": nrm((HN, H), float(1.0 / (HN ** 0.5))),
            "bcm": nrm((1, H), 0.1),
        })
    return params


def make_adjs():
    # Dense mean-aggregation matrices for a (shifting) ring graph per snapshot.
    idx = jnp.arange(V)
    mats = []
    for t in range(T):
        n1 = (idx + 1 + t) % V
        n2 = (idx - 1 - t) % V
        adj = jnp.zeros((V, V), jnp.float32)
        adj = adj.at[idx, n1].add(0.5).at[idx, n2].add(0.5)
        mats.append(adj)
    return jnp.stack(mats)


# ---------------------------------- main ------------------------------------
if __name__ == "__main__":
    key = jax.random.PRNGKey(0)
    kx, kp = jax.random.split(key)
    xs = jax.random.normal(kx, (T, V, C_IN), dtype=jnp.float32)
    adjs = make_adjs()
    params = make_params(kp)
    packed = pack_params(params)           # one-time parameter repacking

    fwd = jax.jit(diagonal_ssm_forward)
    out = jax.block_until_ready(fwd(xs, adjs, packed))

    ref = reference_forward(xs, adjs, params)
    assert out.shape == (V, C_OUT)
    assert bool(jnp.all(jnp.isfinite(out)))
    # Tolerance bounded by the bf16 channel-mixer operands (f32 accumulation);
    # an all-f32 path reaches ~1e-5.
    assert bool(jnp.allclose(out, ref, rtol=1e-2, atol=1e-2)), (
        f"max abs err {float(jnp.max(jnp.abs(out - ref)))}")
    print("KERNEL_OK")
</pallas_src>

<mosaic_0001>
module attributes {stable_mosaic.version = 11 : i64} {
  func.func @fused_forward_kernel(%arg0: memref<96x32xf32, #tpu.memory_space<vmem>>, %arg1: memref<96x96xf32, #tpu.memory_space<vmem>>, %arg2: memref<80x288xf32, #tpu.memory_space<vmem>>, %arg3: memref<80x256xf32, #tpu.memory_space<vmem>>, %arg4: memref<512x32xbf16, #tpu.memory_space<vmem>>, %arg5: memref<64x32xf32, #tpu.memory_space<vmem>>, %arg6: memref<16x32xf32, #tpu.memory_space<vmem>>, %arg7: memref<96x256xbf16, #tpu.memory_space<vmem>>) attributes {dimension_semantics = [], scalar_prefetch = 0 : i64, scratch_operands = 1 : i64, tpu.core_type = #tpu.core_type<tc>} {
    %c0 = arith.constant 0 : index
    %c0_0 = arith.constant 0 : index
    %0 = vector.load %arg0[%c0, %c0_0] : memref<96x32xf32, #tpu.memory_space<vmem>>, vector<96x32xf32>
    %c0_1 = arith.constant 0 : index
    %c0_2 = arith.constant 0 : index
    %1 = vector.load %arg1[%c0_1, %c0_2] : memref<96x96xf32, #tpu.memory_space<vmem>>, vector<96x96xf32>
    %c0_3 = arith.constant 0 : index
    %c0_4 = arith.constant 0 : index
    %2 = vector.load %arg5[%c0_3, %c0_4] : memref<64x32xf32, #tpu.memory_space<vmem>>, vector<64x32xf32>
    %cst = arith.constant 0.000000e+00 : f32
    %3 = vector.broadcast %cst : f32 to vector<16x32xf32>
    %4 = vector.extract_strided_slice %0 {offsets = [0, 0], sizes = [80, 32], strides = [1, 1]} : vector<96x32xf32> to vector<80x32xf32>
    %5 = tpu.concatenate %3, %4 in 0 : vector<16x32xf32>, vector<80x32xf32> -> vector<96x32xf32>
    %6 = vector.extract_strided_slice %0 {offsets = [16, 0], sizes = [80, 32], strides = [1, 1]} : vector<96x32xf32> to vector<80x32xf32>
    %7 = tpu.concatenate %6, %3 in 0 : vector<80x32xf32>, vector<16x32xf32> -> vector<96x32xf32>
    %8 = vector.extract_strided_slice %2 {offsets = [0, 0], sizes = [1, 32], strides = [1, 1]} : vector<64x32xf32> to vector<1x32xf32>
    %9 = vector.broadcast %8 : vector<1x32xf32> to vector<96x32xf32>
    %10 = arith.mulf %5, %9 : vector<96x32xf32>
    %11 = vector.extract_strided_slice %2 {offsets = [1, 0], sizes = [1, 32], strides = [1, 1]} : vector<64x32xf32> to vector<1x32xf32>
    %12 = vector.broadcast %11 : vector<1x32xf32> to vector<96x32xf32>
    %13 = arith.mulf %0, %12 : vector<96x32xf32>
    %14 = arith.addf %10, %13 : vector<96x32xf32>
    %15 = vector.extract_strided_slice %2 {offsets = [2, 0], sizes = [1, 32], strides = [1, 1]} : vector<64x32xf32> to vector<1x32xf32>
    %16 = vector.broadcast %15 : vector<1x32xf32> to vector<96x32xf32>
    %17 = arith.mulf %7, %16 : vector<96x32xf32>
    %18 = arith.addf %14, %17 : vector<96x32xf32>
    %19 = vector.extract_strided_slice %2 {offsets = [4, 0], sizes = [1, 32], strides = [1, 1]} : vector<64x32xf32> to vector<1x32xf32>
    %20 = vector.broadcast %19 : vector<1x32xf32> to vector<96x32xf32>
    %21 = arith.addf %18, %20 : vector<96x32xf32>
    %c0_5 = arith.constant 0 : index
    %c0_6 = arith.constant 0 : index
    %22 = vector.load %arg2[%c0_5, %c0_6] : memref<80x288xf32, #tpu.memory_space<vmem>>, vector<32x288xf32>
    %c64 = arith.constant 64 : index
    %c0_7 = arith.constant 0 : index
    %23 = vector.load %arg2[%c64, %c0_7] : memref<80x288xf32, #tpu.memory_space<vmem>>, vector<1x288xf32>
    %c0_8 = arith.constant 0 : index
    %c0_9 = arith.constant 0 : index
    %24 = vector.load %arg3[%c0_8, %c0_9] : memref<80x256xf32, #tpu.memory_space<vmem>>, vector<32x256xf32>
    %c64_10 = arith.constant 64 : index
    %c0_11 = arith.constant 0 : index
    %25 = vector.load %arg3[%c64_10, %c0_11] : memref<80x256xf32, #tpu.memory_space<vmem>>, vector<1x256xf32>
    %c0_12 = arith.constant 0 : index
    %c0_13 = arith.constant 0 : index
    %26 = vector.load %arg4[%c0_12, %c0_13] : memref<512x32xbf16, #tpu.memory_space<vmem>>, vector<256x32xbf16>
    %27 = vector.extract_strided_slice %2 {offsets = [48, 0], sizes = [1, 32], strides = [1, 1]} : vector<64x32xf32> to vector<1x32xf32>
    %cst_14 = arith.constant dense<0.000000e+00> : vector<96x288xf32>
    %28 = tpu.matmul %21, %22, %cst_14 {dimension_numbers = #tpu.dot_dimension_numbers<[1], [0], [0], [1], [0, 0, 1, 1], [], []>} : vector<96x32xf32>, vector<32x288xf32>, vector<96x288xf32> -> vector<96x288xf32>
    %29 = vector.broadcast %23 : vector<1x288xf32> to vector<96x288xf32>
    %30 = arith.addf %28, %29 : vector<96x288xf32>
    %cst_15 = arith.constant dense<0.000000e+00> : vector<96x32xf32>
    %31 = tpu.matmul %1, %21, %cst_15 {dimension_numbers = #tpu.dot_dimension_numbers<[1], [0], [0], [1], [0, 0, 1, 1], [], []>} : vector<96x96xf32>, vector<96x32xf32>, vector<96x32xf32> -> vector<96x32xf32>
    %32 = vector.extract_strided_slice %30 {offsets = [0, 0], sizes = [96, 256], strides = [1, 1]} : vector<96x288xf32> to vector<96x256xf32>
    %cst_16 = arith.constant dense<0.000000e+00> : vector<96x256xf32>
    %33 = tpu.matmul %31, %24, %cst_16 {dimension_numbers = #tpu.dot_dimension_numbers<[1], [0], [0], [1], [0, 0, 1, 1], [], []>} : vector<96x32xf32>, vector<32x256xf32>, vector<96x256xf32> -> vector<96x256xf32>
    %34 = arith.addf %32, %33 : vector<96x256xf32>
    %35 = vector.extract_strided_slice %30 {offsets = [0, 256], sizes = [96, 32], strides = [1, 1]} : vector<96x288xf32> to vector<96x32xf32>
    %36 = vector.shape_cast %25 : vector<1x256xf32> to vector<1x256xf32>
    %37 = vector.broadcast %36 : vector<1x256xf32> to vector<16x256xf32>
    %cst_17 = arith.constant 0.000000e+00 : f32
    %38 = vector.broadcast %cst_17 : f32 to vector<16x256xf32>
    %39 = arith.mulf %37, %38 : vector<16x256xf32>
    %40 = vector.extract_strided_slice %34 {offsets = [0, 0], sizes = [16, 256], strides = [1, 1]} : vector<96x256xf32> to vector<16x256xf32>
    %41 = arith.addf %39, %40 : vector<16x256xf32>
    %cst_18 = arith.constant 0.000000e+00 : f32
    %42 = vector.broadcast %cst_18 : f32 to vector<16x256xf32>
    %43 = arith.maximumf %41, %42 : vector<16x256xf32>
    %44 = arith.truncf %43 : vector<16x256xf32> to vector<16x256xbf16>
    %c0_19 = arith.constant 0 : index
    %c0_20 = arith.constant 0 : index
    %45 = vector.load %arg7[%c0_19, %c0_20] : memref<96x256xbf16, #tpu.memory_space<vmem>>, vector<16x256xbf16>
    tpu.vector_store %arg7[%c0_19, %c0_20], %44 {strides = array<i32>} : memref<96x256xbf16, #tpu.memory_space<vmem>>, vector<16x256xbf16>,
    %46 = arith.mulf %37, %41 : vector<16x256xf32>
    %47 = vector.extract_strided_slice %34 {offsets = [16, 0], sizes = [16, 256], strides = [1, 1]} : vector<96x256xf32> to vector<16x256xf32>
    %48 = arith.addf %46, %47 : vector<16x256xf32>
    %cst_21 = arith.constant 0.000000e+00 : f32
    %49 = vector.broadcast %cst_21 : f32 to vector<16x256xf32>
    %50 = arith.maximumf %48, %49 : vector<16x256xf32>
    %51 = arith.truncf %50 : vector<16x256xf32> to vector<16x256xbf16>
    %c16 = arith.constant 16 : index
    %c0_22 = arith.constant 0 : index
    %52 = vector.load %arg7[%c16, %c0_22] : memref<96x256xbf16, #tpu.memory_space<vmem>>, vector<16x256xbf16>
    tpu.vector_store %arg7[%c16, %c0_22], %51 {strides = array<i32>} : memref<96x256xbf16, #tpu.memory_space<vmem>>, vector<16x256xbf16>,
    %53 = arith.mulf %37, %48 : vector<16x256xf32>
    %54 = vector.extract_strided_slice %34 {offsets = [32, 0], sizes = [16, 256], strides = [1, 1]} : vector<96x256xf32> to vector<16x256xf32>
    %55 = arith.addf %53, %54 : vector<16x256xf32>
    %cst_23 = arith.constant 0.000000e+00 : f32
    %56 = vector.broadcast %cst_23 : f32 to vector<16x256xf32>
    %57 = arith.maximumf %55, %56 : vector<16x256xf32>
    %58 = arith.truncf %57 : vector<16x256xf32> to vector<16x256xbf16>
    %c32 = arith.constant 32 : index
    %c0_24 = arith.constant 0 : index
    %59 = vector.load %arg7[%c32, %c0_24] : memref<96x256xbf16, #tpu.memory_space<vmem>>, vector<16x256xbf16>
    tpu.vector_store %arg7[%c32, %c0_24], %58 {strides = array<i32>} : memref<96x256xbf16, #tpu.memory_space<vmem>>, vector<16x256xbf16>,
    %60 = arith.mulf %37, %55 : vector<16x256xf32>
    %61 = vector.extract_strided_slice %34 {offsets = [48, 0], sizes = [16, 256], strides = [1, 1]} : vector<96x256xf32> to vector<16x256xf32>
    %62 = arith.addf %60, %61 : vector<16x256xf32>
    %cst_25 = arith.constant 0.000000e+00 : f32
    %63 = vector.broadcast %cst_25 : f32 to vector<16x256xf32>
    %64 = arith.maximumf %62, %63 : vector<16x256xf32>
    %65 = arith.truncf %64 : vector<16x256xf32> to vector<16x256xbf16>
    %c48 = arith.constant 48 : index
    %c0_26 = arith.constant 0 : index
    %66 = vector.load %arg7[%c48, %c0_26] : memref<96x256xbf16, #tpu.memory_space<vmem>>, vector<16x256xbf16>
    tpu.vector_store %arg7[%c48, %c0_26], %65 {strides = array<i32>} : memref<96x256xbf16, #tpu.memory_space<vmem>>, vector<16x256xbf16>,
    %67 = arith.mulf %37, %62 : vector<16x256xf32>
    %68 = vector.extract_strided_slice %34 {offsets = [64, 0], sizes = [16, 256], strides = [1, 1]} : vector<96x256xf32> to vector<16x256xf32>
    %69 = arith.addf %67, %68 : vector<16x256xf32>
    %cst_27 = arith.constant 0.000000e+00 : f32
    %70 = vector.broadcast %cst_27 : f32 to vector<16x256xf32>
    %71 = arith.maximumf %69, %70 : vector<16x256xf32>
    %72 = arith.truncf %71 : vector<16x256xf32> to vector<16x256xbf16>
    %c64_28 = arith.constant 64 : index
    %c0_29 = arith.constant 0 : index
    %73 = vector.load %arg7[%c64_28, %c0_29] : memref<96x256xbf16, #tpu.memory_space<vmem>>, vector<16x256xbf16>
    tpu.vector_store %arg7[%c64_28, %c0_29], %72 {strides = array<i32>} : memref<96x256xbf16, #tpu.memory_space<vmem>>, vector<16x256xbf16>,
    %74 = arith.mulf %37, %69 : vector<16x256xf32>
    %75 = vector.extract_strided_slice %34 {offsets = [80, 0], sizes = [16, 256], strides = [1, 1]} : vector<96x256xf32> to vector<16x256xf32>
    %76 = arith.addf %74, %75 : vector<16x256xf32>
    %cst_30 = arith.constant 0.000000e+00 : f32
    %77 = vector.broadcast %cst_30 : f32 to vector<16x256xf32>
    %78 = arith.maximumf %76, %77 : vector<16x256xf32>
    %79 = arith.truncf %78 : vector<16x256xf32> to vector<16x256xbf16>
    %c80 = arith.constant 80 : index
    %c0_31 = arith.constant 0 : index
    %80 = vector.load %arg7[%c80, %c0_31] : memref<96x256xbf16, #tpu.memory_space<vmem>>, vector<16x256xbf16>
    tpu.vector_store %arg7[%c80, %c0_31], %79 {strides = array<i32>} : memref<96x256xbf16, #tpu.memory_space<vmem>>, vector<16x256xbf16>,
    %c0_32 = arith.constant 0 : index
    %c0_33 = arith.constant 0 : index
    %81 = vector.load %arg7[%c0_32, %c0_33] : memref<96x256xbf16, #tpu.memory_space<vmem>>, vector<96x256xbf16>
    %cst_34 = arith.constant dense<0.000000e+00> : vector<96x32xf32>
    %82 = tpu.matmul %81, %26, %cst_34 {dimension_numbers = #tpu.dot_dimension_numbers<[1], [0], [0], [1], [0, 0, 1, 1], [], []>} : vector<96x256xbf16>, vector<256x32xbf16>, vector<96x32xf32> -> vector<96x32xf32>
    %83 = vector.broadcast %27 : vector<1x32xf32> to vector<96x32xf32>
    %84 = arith.addf %82, %83 : vector<96x32xf32>
    %85 = arith.addf %84, %35 : vector<96x32xf32>
    %c32_35 = arith.constant 32 : index
    %c0_36 = arith.constant 0 : index
    %86 = vector.load %arg2[%c32_35, %c0_36] : memref<80x288xf32, #tpu.memory_space<vmem>>, vector<32x288xf32>
    %c72 = arith.constant 72 : index
    %c0_37 = arith.constant 0 : index
    %87 = vector.load %arg2[%c72, %c0_37] : memref<80x288xf32, #tpu.memory_space<vmem>>, vector<1x288xf32>
    %c32_38 = arith.constant 32 : index
    %c0_39 = arith.constant 0 : index
    %88 = vector.load %arg3[%c32_38, %c0_39] : memref<80x256xf32, #tpu.memory_space<vmem>>, vector<32x256xf32>
    %c72_40 = arith.constant 72 : index
    %c0_41 = arith.constant 0 : index
    %89 = vector.load %arg3[%c72_40, %c0_41] : memref<80x256xf32, #tpu.memory_space<vmem>>, vector<1x256xf32>
    %c256 = arith.constant 256 : index
    %c0_42 = arith.constant 0 : index
    %90 = vector.load %arg4[%c256, %c0_42] : memref<512x32xbf16, #tpu.memory_space<vmem>>, vector<256x32xbf16>
    %91 = vector.extract_strided_slice %2 {offsets = [56, 0], sizes = [1, 32], strides = [1, 1]} : vector<64x32xf32> to vector<1x32xf32>
    %cst_43 = arith.constant dense<0.000000e+00> : vector<96x288xf32>
    %92 = tpu.matmul %85, %86, %cst_43 {dimension_numbers = #tpu.dot_dimension_numbers<[1], [0], [0], [1], [0, 0, 1, 1], [], []>} : vector<96x32xf32>, vector<32x288xf32>, vector<96x288xf32> -> vector<96x288xf32>
    %93 = vector.broadcast %87 : vector<1x288xf32> to vector<96x288xf32>
    %94 = arith.addf %92, %93 : vector<96x288xf32>
    %cst_44 = arith.constant dense<0.000000e+00> : vector<96x32xf32>
    %95 = tpu.matmul %1, %85, %cst_44 {dimension_numbers = #tpu.dot_dimension_numbers<[1], [0], [0], [1], [0, 0, 1, 1], [], []>} : vector<96x96xf32>, vector<96x32xf32>, vector<96x32xf32> -> vector<96x32xf32>
    %96 = vector.extract_strided_slice %94 {offsets = [0, 0], sizes = [96, 256], strides = [1, 1]} : vector<96x288xf32> to vector<96x256xf32>
    %cst_45 = arith.constant dense<0.000000e+00> : vector<96x256xf32>
    %97 = tpu.matmul %95, %88, %cst_45 {dimension_numbers = #tpu.dot_dimension_numbers<[1], [0], [0], [1], [0, 0, 1, 1], [], []>} : vector<96x32xf32>, vector<32x256xf32>, vector<96x256xf32> -> vector<96x256xf32>
    %98 = arith.addf %96, %97 : vector<96x256xf32>
    %99 = vector.extract_strided_slice %94 {offsets = [0, 256], sizes = [96, 32], strides = [1, 1]} : vector<96x288xf32> to vector<96x32xf32>
    %100 = vector.shape_cast %89 : vector<1x256xf32> to vector<1x256xf32>
    %101 = vector.broadcast %100 : vector<1x256xf32> to vector<16x256xf32>
    %cst_46 = arith.constant 0.000000e+00 : f32
    %102 = vector.broadcast %cst_46 : f32 to vector<16x256xf32>
    %103 = arith.mulf %101, %102 : vector<16x256xf32>
    %104 = vector.extract_strided_slice %98 {offsets = [0, 0], sizes = [16, 256], strides = [1, 1]} : vector<96x256xf32> to vector<16x256xf32>
    %105 = arith.addf %103, %104 : vector<16x256xf32>
    %cst_47 = arith.constant 0.000000e+00 : f32
    %106 = vector.broadcast %cst_47 : f32 to vector<16x256xf32>
    %107 = arith.maximumf %105, %106 : vector<16x256xf32>
    %108 = arith.truncf %107 : vector<16x256xf32> to vector<16x256xbf16>
    %c0_48 = arith.constant 0 : index
    %c0_49 = arith.constant 0 : index
    %109 = vector.load %arg7[%c0_48, %c0_49] : memref<96x256xbf16, #tpu.memory_space<vmem>>, vector<16x256xbf16>
    tpu.vector_store %arg7[%c0_48, %c0_49], %108 {strides = array<i32>} : memref<96x256xbf16, #tpu.memory_space<vmem>>, vector<16x256xbf16>,
    %110 = arith.mulf %101, %105 : vector<16x256xf32>
    %111 = vector.extract_strided_slice %98 {offsets = [16, 0], sizes = [16, 256], strides = [1, 1]} : vector<96x256xf32> to vector<16x256xf32>
    %112 = arith.addf %110, %111 : vector<16x256xf32>
    %cst_50 = arith.constant 0.000000e+00 : f32
    %113 = vector.broadcast %cst_50 : f32 to vector<16x256xf32>
    %114 = arith.maximumf %112, %113 : vector<16x256xf32>
    %115 = arith.truncf %114 : vector<16x256xf32> to vector<16x256xbf16>
    %c16_51 = arith.constant 16 : index
    %c0_52 = arith.constant 0 : index
    %116 = vector.load %arg7[%c16_51, %c0_52] : memref<96x256xbf16, #tpu.memory_space<vmem>>, vector<16x256xbf16>
    tpu.vector_store %arg7[%c16_51, %c0_52], %115 {strides = array<i32>} : memref<96x256xbf16, #tpu.memory_space<vmem>>, vector<16x256xbf16>,
    %117 = arith.mulf %101, %112 : vector<16x256xf32>
    %118 = vector.extract_strided_slice %98 {offsets = [32, 0], sizes = [16, 256], strides = [1, 1]} : vector<96x256xf32> to vector<16x256xf32>
    %119 = arith.addf %117, %118 : vector<16x256xf32>
    %cst_53 = arith.constant 0.000000e+00 : f32
    %120 = vector.broadcast %cst_53 : f32 to vector<16x256xf32>
    %121 = arith.maximumf %119, %120 : vector<16x256xf32>
    %122 = arith.truncf %121 : vector<16x256xf32> to vector<16x256xbf16>
    %c32_54 = arith.constant 32 : index
    %c0_55 = arith.constant 0 : index
    %123 = vector.load %arg7[%c32_54, %c0_55] : memref<96x256xbf16, #tpu.memory_space<vmem>>, vector<16x256xbf16>
    tpu.vector_store %arg7[%c32_54, %c0_55], %122 {strides = array<i32>} : memref<96x256xbf16, #tpu.memory_space<vmem>>, vector<16x256xbf16>,
    %124 = arith.mulf %101, %119 : vector<16x256xf32>
    %125 = vector.extract_strided_slice %98 {offsets = [48, 0], sizes = [16, 256], strides = [1, 1]} : vector<96x256xf32> to vector<16x256xf32>
    %126 = arith.addf %124, %125 : vector<16x256xf32>
    %cst_56 = arith.constant 0.000000e+00 : f32
    %127 = vector.broadcast %cst_56 : f32 to vector<16x256xf32>
    %128 = arith.maximumf %126, %127 : vector<16x256xf32>
    %129 = arith.truncf %128 : vector<16x256xf32> to vector<16x256xbf16>
    %c48_57 = arith.constant 48 : index
    %c0_58 = arith.constant 0 : index
    %130 = vector.load %arg7[%c48_57, %c0_58] : memref<96x256xbf16, #tpu.memory_space<vmem>>, vector<16x256xbf16>
    tpu.vector_store %arg7[%c48_57, %c0_58], %129 {strides = array<i32>} : memref<96x256xbf16, #tpu.memory_space<vmem>>, vector<16x256xbf16>,
    %131 = arith.mulf %101, %126 : vector<16x256xf32>
    %132 = vector.extract_strided_slice %98 {offsets = [64, 0], sizes = [16, 256], strides = [1, 1]} : vector<96x256xf32> to vector<16x256xf32>
    %133 = arith.addf %131, %132 : vector<16x256xf32>
    %cst_59 = arith.constant 0.000000e+00 : f32
    %134 = vector.broadcast %cst_59 : f32 to vector<16x256xf32>
    %135 = arith.maximumf %133, %134 : vector<16x256xf32>
    %136 = arith.truncf %135 : vector<16x256xf32> to vector<16x256xbf16>
    %c64_60 = arith.constant 64 : index
    %c0_61 = arith.constant 0 : index
    %137 = vector.load %arg7[%c64_60, %c0_61] : memref<96x256xbf16, #tpu.memory_space<vmem>>, vector<16x256xbf16>
    tpu.vector_store %arg7[%c64_60, %c0_61], %136 {strides = array<i32>} : memref<96x256xbf16, #tpu.memory_space<vmem>>, vector<16x256xbf16>,
    %138 = arith.mulf %101, %133 : vector<16x256xf32>
    %139 = vector.extract_strided_slice %98 {offsets = [80, 0], sizes = [16, 256], strides = [1, 1]} : vector<96x256xf32> to vector<16x256xf32>
    %140 = arith.addf %138, %139 : vector<16x256xf32>
    %cst_62 = arith.constant 0.000000e+00 : f32
    %141 = vector.broadcast %cst_62 : f32 to vector<16x256xf32>
    %142 = arith.maximumf %140, %141 : vector<16x256xf32>
    %143 = arith.truncf %142 : vector<16x256xf32> to vector<16x256xbf16>
    %c80_63 = arith.constant 80 : index
    %c0_64 = arith.constant 0 : index
    %144 = vector.load %arg7[%c80_63, %c0_64] : memref<96x256xbf16, #tpu.memory_space<vmem>>, vector<16x256xbf16>
    tpu.vector_store %arg7[%c80_63, %c0_64], %143 {strides = array<i32>} : memref<96x256xbf16, #tpu.memory_space<vmem>>, vector<16x256xbf16>,
    %c0_65 = arith.constant 0 : index
    %c0_66 = arith.constant 0 : index
    %145 = vector.load %arg7[%c0_65, %c0_66] : memref<96x256xbf16, #tpu.memory_space<vmem>>, vector<96x256xbf16>
    %cst_67 = arith.constant dense<0.000000e+00> : vector<96x32xf32>
    %146 = tpu.matmul %145, %90, %cst_67 {dimension_numbers = #tpu.dot_dimension_numbers<[1], [0], [0], [1], [0, 0, 1, 1], [], []>} : vector<96x256xbf16>, vector<256x32xbf16>, vector<96x32xf32> -> vector<96x32xf32>
    %147 = vector.broadcast %91 : vector<1x32xf32> to vector<96x32xf32>
    %148 = arith.addf %146, %147 : vector<96x32xf32>
    %149 = arith.addf %148, %99 : vector<96x32xf32>
    %150 = vector.extract_strided_slice %2 {offsets = [8, 0], sizes = [32, 32], strides = [1, 1]} : vector<64x32xf32> to vector<32x32xf32>
    %151 = vector.extract_strided_slice %2 {offsets = [40, 0], sizes = [1, 32], strides = [1, 1]} : vector<64x32xf32> to vector<1x32xf32>
    %152 = vector.extract_strided_slice %149 {offsets = [80, 0], sizes = [16, 32], strides = [1, 1]} : vector<96x32xf32> to vector<16x32xf32>
    %cst_68 = arith.constant dense<0.000000e+00> : vector<16x32xf32>
    %153 = tpu.matmul %152, %150, %cst_68 {dimension_numbers = #tpu.dot_dimension_numbers<[1], [0], [0], [1], [0, 0, 1, 1], [], []>} : vector<16x32xf32>, vector<32x32xf32>, vector<16x32xf32> -> vector<16x32xf32>
    %154 = vector.broadcast %151 : vector<1x32xf32> to vector<16x32xf32>
    %155 = arith.addf %153, %154 : vector<16x32xf32>
    %c0_69 = arith.constant 0 : index
    %c0_70 = arith.constant 0 : index
    %156 = vector.load %arg6[%c0_69, %c0_70] : memref<16x32xf32, #tpu.memory_space<vmem>>, vector<16x32xf32>
    tpu.vector_store %arg6[%c0_69, %c0_70], %155 {strides = array<i32>} : memref<16x32xf32, #tpu.memory_space<vmem>>, vector<16x32xf32>,
    return
  }
}

</mosaic_0001>

<llo_original>
// kernel: diagonal_ssm_forward.1
$region0: #{diagonal_ssm_forward.1}
  #allocation0 [shape = 'u32[]', space=smem, size = 0x4, offset = 0x4, fixed_abs, tag = 'smem constant byte address 0x4 - core index']
  #allocation1 [shape = 'u32[72,128]{1,0:T(1,128)}', space=vmem, size = 0x9000, scoped, tag = 'internal scratch']
  #allocation2 [shape = 'bf16[96,256]{1,0:T(8,128)(2,1)}', space=vmem, size = 0xc000, scoped, tag = 'scratch operand']
  %s0 = inlined_call_operand.vmem [shape: f32[96,32], index: 0, kind: input, shape index: {}]
  %s1 = inlined_call_operand.vmem [shape: f32[96,96], index: 1, kind: input, shape index: {}]
  %s2 = inlined_call_operand.vmem [shape: f32[80,288], index: 2, kind: input, shape index: {}]
  %s3 = inlined_call_operand.vmem [shape: f32[80,256], index: 3, kind: input, shape index: {}]
  %s4 = inlined_call_operand.vmem [shape: bf16[512,32], index: 4, kind: input, shape index: {}]
  %s5 = inlined_call_operand.vmem [shape: f32[64,32], index: 5, kind: input, shape index: {}]
  %s6 = inlined_call_operand.vmem [shape: f32[16,32], index: 6, kind: output, shape index: {}]
  %s7 = sld [smem:[#allocation0]]
  $region34: #{diagonal_ssm_forward.1} parent=0
    _
  %s9 = ssub.s32 1, %s7
  %s10 = scalar_select 0, %s9, %s7
  // Predicated region
  $region2: #{diagonal_ssm_forward.1} parent=0 // pred_check
    _
  $region3: #{diagonal_ssm_forward.1} parent=0 // pred_check_branch
    %12 = sbr.rel (0) target = $region5
  $region4: #{diagonal_ssm_forward.1} parent=0 // pred_region
    _
  $region5: #{diagonal_ssm_forward.1} parent=0 // pred_fallthru
    _
  // Predicated region
  $region6: #{diagonal_ssm_forward.1} parent=0 // pred_check
    _
  $region7: #{diagonal_ssm_forward.1} parent=0 // pred_check_branch
    %14 = sbr.rel (0) target = $region9
  $region8: #{diagonal_ssm_forward.1} parent=0 // pred_region
    _
  $region9: #{diagonal_ssm_forward.1} parent=0 // pred_fallthru
    _
  // Predicated region
  $region10: #{diagonal_ssm_forward.1} parent=0 // pred_check
    _
  $region11: #{diagonal_ssm_forward.1} parent=0 // pred_check_branch
    %16 = sbr.rel (0) target = $region13
  $region12: #{diagonal_ssm_forward.1} parent=0 // pred_region
    _
  $region13: #{diagonal_ssm_forward.1} parent=0 // pred_fallthru
    _
  // Predicated region
  $region14: #{diagonal_ssm_forward.1} parent=0 // pred_check
    _
  $region15: #{diagonal_ssm_forward.1} parent=0 // pred_check_branch
    %18 = sbr.rel (0) target = $region17
  $region16: #{diagonal_ssm_forward.1} parent=0 // pred_region
    _
  $region17: #{diagonal_ssm_forward.1} parent=0 // pred_fallthru
    _
  // Predicated region
  $region18: #{diagonal_ssm_forward.1} parent=0 // pred_check
    _
  $region19: #{diagonal_ssm_forward.1} parent=0 // pred_check_branch
    %20 = sbr.rel (0) target = $region21
  $region20: #{diagonal_ssm_forward.1} parent=0 // pred_region
    _
  $region21: #{diagonal_ssm_forward.1} parent=0 // pred_fallthru
    _
  // Predicated region
  $region22: #{diagonal_ssm_forward.1} parent=0 // pred_check
    _
  $region23: #{diagonal_ssm_forward.1} parent=0 // pred_check_branch
    %22 = sbr.rel (0) target = $region25
  $region24: #{diagonal_ssm_forward.1} parent=0 // pred_region
    _
  $region25: #{diagonal_ssm_forward.1} parent=0 // pred_fallthru
    _
  %v23 = vld [vmem:[%s0] sm:$0xff]
  %v24 = vld [vmem:[%s0 + $0x8] sm:$0xff]
  %v25 = vld [vmem:[%s0 + $0x10] sm:$0xff]
  %v26 = vld [vmem:[%s0 + $0x18] sm:$0xff]
  %v27 = vld [vmem:[%s0 + $0x20] sm:$0xff]
  %v28 = vld [vmem:[%s0 + $0x28] sm:$0xff]
  %v29 = vld [vmem:[%s0 + $0x30] sm:$0xff]
  %v30 = vld [vmem:[%s0 + $0x38] sm:$0xff]
  %v31 = vld [vmem:[%s0 + $0x40] sm:$0xff]
  %v32 = vld [vmem:[%s0 + $0x48] sm:$0xff]
  %v33 = vld [vmem:[%s0 + $0x50] sm:$0xff]
  %v34 = vld [vmem:[%s0 + $0x58] sm:$0xff]
  %v35 = vld [vmem:[%s1] sm:$0xff]
  %v36 = vld [vmem:[%s1 + $0x8] sm:$0xff]
  %v37 = vld [vmem:[%s1 + $0x10] sm:$0xff]
  %v38 = vld [vmem:[%s1 + $0x18] sm:$0xff]
  %v39 = vld [vmem:[%s1 + $0x20] sm:$0xff]
  %v40 = vld [vmem:[%s1 + $0x28] sm:$0xff]
  %v41 = vld [vmem:[%s1 + $0x30] sm:$0xff]
  %v42 = vld [vmem:[%s1 + $0x38] sm:$0xff]
  %v43 = vld [vmem:[%s1 + $0x40] sm:$0xff]
  %v44 = vld [vmem:[%s1 + $0x48] sm:$0xff]
  %v45 = vld [vmem:[%s1 + $0x50] sm:$0xff]
  %v46 = vld [vmem:[%s1 + $0x58] sm:$0xff]
  %v47 = vld [vmem:[%s5] sm:$0xff]
  %v48 = vld [vmem:[%s5 + $0x8] sm:$0xff]
  %v49 = vld [vmem:[%s5 + $0x10] sm:$0xff]
  %v50 = vld [vmem:[%s5 + $0x18] sm:$0xff]
  %v51 = vld [vmem:[%s5 + $0x20] sm:$0xff]
  %v52 = vld [vmem:[%s5 + $0x28] sm:$0xff]
  %v53 = vld [vmem:[%s5 + $0x30] sm:$0xff]
  %v54 = vld [vmem:[%s5 + $0x38] sm:$0xff]
  %v55 = vperm.slane %v47, 0
  %v56 = vmul.f32 %v55, 0.0
  %v57 = vmul.f32 %v23, %v55
  %v58 = vmul.f32 %v24, %v55
  %v59 = vmul.f32 %v25, %v55
  %v60 = vmul.f32 %v26, %v55
  %v61 = vmul.f32 %v27, %v55
  %v62 = vmul.f32 %v28, %v55
  %v63 = vmul.f32 %v29, %v55
  %v64 = vmul.f32 %v30, %v55
  %v65 = vmul.f32 %v31, %v55
  %v66 = vmul.f32 %v32, %v55
  %v67 = vperm.slane %v47, 1
  %v68 = vmul.f32 %v23, %v67
  %v69 = vmul.f32 %v24, %v67
  %v70 = vmul.f32 %v25, %v67
  %v71 = vmul.f32 %v26, %v67
  %v72 = vmul.f32 %v27, %v67
  %v73 = vmul.f32 %v28, %v67
  %v74 = vmul.f32 %v29, %v67
  %v75 = vmul.f32 %v30, %v67
  %v76 = vmul.f32 %v31, %v67
  %v77 = vmul.f32 %v32, %v67
  %v78 = vmul.f32 %v33, %v67
  %v79 = vmul.f32 %v34, %v67
  %v80 = vadd.f32 %v56, %v68
  %v81 = vadd.f32 %v56, %v69
  %v82 = vadd.f32 %v57, %v70
  %v83 = vadd.f32 %v58, %v71
  %v84 = vadd.f32 %v59, %v72
  %v85 = vadd.f32 %v60, %v73
  %v86 = vadd.f32 %v61, %v74
  %v87 = vadd.f32 %v62, %v75
  %v88 = vadd.f32 %v63, %v76
  %v89 = vadd.f32 %v64, %v77
  %v90 = vadd.f32 %v65, %v78
  %v91 = vadd.f32 %v66, %v79
  %v92 = vperm.slane %v47, 2
  %v93 = vmul.f32 %v25, %v92
  %v94 = vmul.f32 %v26, %v92
  %v95 = vmul.f32 %v27, %v92
  %v96 = vmul.f32 %v28, %v92
  %v97 = vmul.f32 %v29, %v92
  %v98 = vmul.f32 %v30, %v92
  %v99 = vmul.f32 %v31, %v92
  %v100 = vmul.f32 %v32, %v92
  %v101 = vmul.f32 %v33, %v92
  %v102 = vmul.f32 %v34, %v92
  %v103 = vmul.f32 %v92, 0.0
  %v104 = vadd.f32 %v80, %v93
  %v105 = vadd.f32 %v81, %v94
  %v106 = vadd.f32 %v82, %v95
  %v107 = vadd.f32 %v83, %v96
  %v108 = vadd.f32 %v84, %v97
  %v109 = vadd.f32 %v85, %v98
  %v110 = vadd.f32 %v86, %v99
  %v111 = vadd.f32 %v87, %v100
  %v112 = vadd.f32 %v88, %v101
  %v113 = vadd.f32 %v89, %v102
  %v114 = vadd.f32 %v90, %v103
  %v115 = vadd.f32 %v91, %v103
  %v116 = vperm.slane %v47, 4
  %v117 = vadd.f32 %v104, %v116
  %v118 = vadd.f32 %v105, %v116
  %v119 = vadd.f32 %v106, %v116
  %v120 = vadd.f32 %v107, %v116
  %v121 = vadd.f32 %v108, %v116
  %v122 = vadd.f32 %v109, %v116
  %v123 = vadd.f32 %v110, %v116
  %v124 = vadd.f32 %v111, %v116
  %v125 = vadd.f32 %v112, %v116
  %v126 = vadd.f32 %v113, %v116
  %v127 = vadd.f32 %v114, %v116
  %v128 = vadd.f32 %v115, %v116
  %v129 = vld [vmem:[%s2] sm:$0xff]
  %v130 = vld [vmem:[%s2 + $0x8] sm:$0xff]
  %v131 = vld [vmem:[%s2 + $0x10] sm:$0xff]
  %v132 = vld [vmem:[%s2 + $0x18] sm:$0xff]
  %v133 = vld [vmem:[%s2 + $0x20] sm:$0xff]
  %v134 = vld [vmem:[%s2 + $0x28] sm:$0xff]
  %v135 = vld [vmem:[%s2 + $0x30] sm:$0xff]
  %v136 = vld [vmem:[%s2 + $0x38] sm:$0xff]
  %v137 = vld [vmem:[%s2 + $0x40] sm:$0xff]
  %v138 = vld [vmem:[%s2 + $0x48] sm:$0xff]
  %v139 = vld [vmem:[%s2 + $0x50] sm:$0xff]
  %v140 = vld [vmem:[%s2 + $0x58] sm:$0xff]
  %s141 = scalar_lea.vmem %s2, 192
  %v142 = vld [vmem:[%s141] ss:$8 sm:$0x7]
  %v143 = vld [vmem:[%s3] sm:$0xff]
  %v144 = vld [vmem:[%s3 + $0x8] sm:$0xff]
  %v145 = vld [vmem:[%s3 + $0x10] sm:$0xff]
  %v146 = vld [vmem:[%s3 + $0x18] sm:$0xff]
  %v147 = vld [vmem:[%s3 + $0x20] sm:$0xff]
  %v148 = vld [vmem:[%s3 + $0x28] sm:$0xff]
  %v149 = vld [vmem:[%s3 + $0x30] sm:$0xff]
  %v150 = vld [vmem:[%s3 + $0x38] sm:$0xff]
  %s151 = scalar_lea.vmem %s3, 128
  %v152 = vld [vmem:[%s151] ss:$8 sm:$0x3]
  %v153 = vld [vmem:[%s4] sm:$0xf]
  %v154 = vld [vmem:[%s4 + $0x4] sm:$0xf]
  %v155 = vld [vmem:[%s4 + $0x8] sm:$0xf]
  %v156 = vld [vmem:[%s4 + $0xc] sm:$0xf]
  %v157 = vld [vmem:[%s4 + $0x10] sm:$0xf]
  %v158 = vld [vmem:[%s4 + $0x14] sm:$0xf]
  %v159 = vld [vmem:[%s4 + $0x18] sm:$0xf]
  %v160 = vld [vmem:[%s4 + $0x1c] sm:$0xf]
  %v161 = vld [vmem:[%s4 + $0x20] sm:$0xf]
  %v162 = vld [vmem:[%s4 + $0x24] sm:$0xf]
  %v163 = vld [vmem:[%s4 + $0x28] sm:$0xf]
  %v164 = vld [vmem:[%s4 + $0x2c] sm:$0xf]
  %v165 = vld [vmem:[%s4 + $0x30] sm:$0xf]
  %v166 = vld [vmem:[%s4 + $0x34] sm:$0xf]
  %v167 = vld [vmem:[%s4 + $0x38] sm:$0xf]
  %v168 = vld [vmem:[%s4 + $0x3c] sm:$0xf]
  %v169 = vld [vmem:[%s4 + $0x40] sm:$0xf]
  %v170 = vld [vmem:[%s4 + $0x44] sm:$0xf]
  %v171 = vld [vmem:[%s4 + $0x48] sm:$0xf]
  %v172 = vld [vmem:[%s4 + $0x4c] sm:$0xf]
  %v173 = vld [vmem:[%s4 + $0x50] sm:$0xf]
  %v174 = vld [vmem:[%s4 + $0x54] sm:$0xf]
  %v175 = vld [vmem:[%s4 + $0x58] sm:$0xf]
  %v176 = vld [vmem:[%s4 + $0x5c] sm:$0xf]
  %v177 = vld [vmem:[%s4 + $0x60] sm:$0xf]
  %v178 = vld [vmem:[%s4 + $0x64] sm:$0xf]
  %v179 = vld [vmem:[%s4 + $0x68] sm:$0xf]
  %v180 = vld [vmem:[%s4 + $0x6c] sm:$0xf]
  %v181 = vld [vmem:[%s4 + $0x70] sm:$0xf]
  %v182 = vld [vmem:[%s4 + $0x74] sm:$0xf]
  %v183 = vld [vmem:[%s4 + $0x78] sm:$0xf]
  %v184 = vld [vmem:[%s4 + $0x7c] sm:$0xf]
  %v186 = vperm.slane %v142, 0
  %v187 = vperm.slane %v142, 1
  %v188 = vperm.slane %v142, 2
  %vm192 = vcmask 261120
  %v194 = vsel %vm192, %v117, 0
  %v197 = vsel %vm192, %v118, 0
  %v200 = vsel %vm192, %v119, 0
  %v203 = vsel %vm192, %v120, 0
  %v206 = vsel %vm192, %v121, 0
  %v209 = vsel %vm192, %v122, 0
  %v212 = vsel %vm192, %v123, 0
  %v215 = vsel %vm192, %v124, 0
  %v218 = vsel %vm192, %v125, 0
  %v221 = vsel %vm192, %v126, 0
  %v224 = vsel %vm192, %v127, 0
  %v227 = vsel %vm192, %v128, 0
  %229 = vmatpush.msra.mxu0 0.0
  %230 = vmatpush.msra.mxu0 0.0
  %231 = vmatpush.msra.mxu0 0.0
  %232 = vmatpush.msra.mxu0 0.0
  %233 = vmatpush.msra.mxu0 0.0
  %234 = vmatpush.msra.mxu0 0.0
  %235 = vmatpush.msra.mxu0 0.0
  %236 = vmatpush.msra.mxu0 0.0
  %237 = vmatpush.msra.mxu0 0.0
  %238 = vmatpush.msra.mxu0 0.0
  %239 = vmatpush.msra.mxu0 0.0
  %240 = vmatpush.msra.mxu0 0.0
  %241 = vmatpush.msra.mxu0 %v138
  %242 = vmatpush.msra.mxu0 %v135
  %243 = vmatpush.msra.mxu0 %v132
  %244 = vmatpush.msra.mxu0 %v129
  %245 = vmatmul.f32.gmra.mxu0 %v194
  %v246 = vpop.f32.mrf.mxu0
  %v247 = vadd.f32 %v186, %v246
  %248 = vmatmul.f32.gmra.mxu0 %v197
  %v249 = vpop.f32.mrf.mxu0
  %v250 = vadd.f32 %v186, %v249
  %251 = vmatmul.f32.gmra.mxu0 %v200
  %v252 = vpop.f32.mrf.mxu0
  %v253 = vadd.f32 %v186, %v252
  %254 = vmatmul.f32.gmra.mxu0 %v203
  %v255 = vpop.f32.mrf.mxu0
  %v256 = vadd.f32 %v186, %v255
  %257 = vmatmul.f32.gmra.mxu0 %v206
  %v258 = vpop.f32.mrf.mxu0
  %v259 = vadd.f32 %v186, %v258
  %260 = vmatmul.f32.gmra.mxu0 %v209
  %v261 = vpop.f32.mrf.mxu0
  %v262 = vadd.f32 %v186, %v261
  %263 = vmatmul.f32.gmra.mxu0 %v212
  %v264 = vpop.f32.mrf.mxu0
  %v265 = vadd.f32 %v186, %v264
  %266 = vmatmul.f32.gmra.mxu0 %v215
  %v267 = vpop.f32.mrf.mxu0
  %v268 = vadd.f32 %v186, %v267
  %269 = vmatmul.f32.gmra.mxu0 %v218
  %v270 = vpop.f32.mrf.mxu0
  %v271 = vadd.f32 %v186, %v270
  %272 = vmatmul.f32.gmra.mxu0 %v221
  %v273 = vpop.f32.mrf.mxu0
  %v274 = vadd.f32 %v186, %v273
  %275 = vmatmul.f32.gmra.mxu0 %v224
  %v276 = vpop.f32.mrf.mxu0
  %v277 = vadd.f32 %v186, %v276
  %278 = vmatmul.f32.gmra.mxu0 %v227
  %v279 = vpop.f32.mrf.mxu0
  %v280 = vadd.f32 %v186, %v279
  %281 = vdwg.mxu0
  %282 = vmatpush.msra.mxu0 0.0
  %283 = vmatpush.msra.mxu0 0.0
  %284 = vmatpush.msra.mxu0 0.0
  %285 = vmatpush.msra.mxu0 0.0
  %286 = vmatpush.msra.mxu0 0.0
  %287 = vmatpush.msra.mxu0 0.0
  %288 = vmatpush.msra.mxu0 0.0
  %289 = vmatpush.msra.mxu0 0.0
  %290 = vmatpush.msra.mxu0 0.0
  %291 = vmatpush.msra.mxu0 0.0
  %292 = vmatpush.msra.mxu0 0.0
  %293 = vmatpush.msra.mxu0 0.0
  %294 = vmatpush.msra.mxu0 %v139
  %295 = vmatpush.msra.mxu0 %v136
  %296 = vmatpush.msra.mxu0 %v133
  %297 = vmatpush.msra.mxu0 %v130
  %298 = vmatmul.f32.gmra.mxu0 %v194
  %v299 = vpop.f32.mrf.mxu0
  %v300 = vadd.f32 %v187, %v299
  %301 = vmatmul.f32.gmra.mxu0 %v197
  %v302 = vpop.f32.mrf.mxu0
  %v303 = vadd.f32 %v187, %v302
  %304 = vmatmul.f32.gmra.mxu0 %v200
  %v305 = vpop.f32.mrf.mxu0
  %v306 = vadd.f32 %v187, %v305
  %307 = vmatmul.f32.gmra.mxu0 %v203
  %v308 = vpop.f32.mrf.mxu0
  %v309 = vadd.f32 %v187, %v308
  %310 = vmatmul.f32.gmra.mxu0 %v206
  %v311 = vpop.f32.mrf.mxu0
  %v312 = vadd.f32 %v187, %v311
  %313 = vmatmul.f32.gmra.mxu0 %v209
  %v314 = vpop.f32.mrf.mxu0
  %v315 = vadd.f32 %v187, %v314
  %316 = vmatmul.f32.gmra.mxu0 %v212
  %v317 = vpop.f32.mrf.mxu0
  %v318 = vadd.f32 %v187, %v317
  %319 = vmatmul.f32.gmra.mxu0 %v215
  %v320 = vpop.f32.mrf.mxu0
  %v321 = vadd.f32 %v187, %v320
  %322 = vmatmul.f32.gmra.mxu0 %v218
  %v323 = vpop.f32.mrf.mxu0
  %v324 = vadd.f32 %v187, %v323
  %325 = vmatmul.f32.gmra.mxu0 %v221
  %v326 = vpop.f32.mrf.mxu0
  %v327 = vadd.f32 %v187, %v326
  %328 = vmatmul.f32.gmra.mxu0 %v224
  %v329 = vpop.f32.mrf.mxu0
  %v330 = vadd.f32 %v187, %v329
  %331 = vmatmul.f32.gmra.mxu0 %v227
  %v332 = vpop.f32.mrf.mxu0
  %v333 = vadd.f32 %v187, %v332
  %334 = vdwg.mxu0
  %335 = vmatpush.msra.mxu0 0.0
  %336 = vmatpush.msra.mxu0 0.0
  %337 = vmatpush.msra.mxu0 0.0
  %338 = vmatpush.msra.mxu0 0.0
  %339 = vmatpush.msra.mxu0 0.0
  %340 = vmatpush.msra.mxu0 0.0
  %341 = vmatpush.msra.mxu0 0.0
  %342 = vmatpush.msra.mxu0 0.0
  %343 = vmatpush.msra.mxu0 0.0
  %344 = vmatpush.msra.mxu0 0.0
  %345 = vmatpush.msra.mxu0 0.0
  %346 = vmatpush.msra.mxu0 0.0
  %347 = vmatpush.msra.mxu0 %v140
  %348 = vmatpush.msra.mxu0 %v137
  %349 = vmatpush.msra.mxu0 %v134
  %350 = vmatpush.msra.mxu0 %v131
  %351 = vmatmul.f32.gmra.mxu0 %v194
  %v352 = vpop.f32.mrf.mxu0
  %v353 = vadd.f32 %v188, %v352
  %354 = vmatmul.f32.gmra.mxu0 %v197
  %v355 = vpop.f32.mrf.mxu0
  %v356 = vadd.f32 %v188, %v355
  %357 = vmatmul.f32.gmra.mxu0 %v200
  %v358 = vpop.f32.mrf.mxu0
  %v359 = vadd.f32 %v188, %v358
  %360 = vmatmul.f32.gmra.mxu0 %v203
  %v361 = vpop.f32.mrf.mxu0
  %v362 = vadd.f32 %v188, %v361
  %363 = vmatmul.f32.gmra.mxu0 %v206
  %v364 = vpop.f32.mrf.mxu0
  %v365 = vadd.f32 %v188, %v364
  %366 = vmatmul.f32.gmra.mxu0 %v209
  %v367 = vpop.f32.mrf.mxu0
  %v368 = vadd.f32 %v188, %v367
  %369 = vmatmul.f32.gmra.mxu0 %v212
  %v370 = vpop.f32.mrf.mxu0
  %v371 = vadd.f32 %v188, %v370
  %372 = vmatmul.f32.gmra.mxu0 %v215
  %v373 = vpop.f32.mrf.mxu0
  %v374 = vadd.f32 %v188, %v373
  %375 = vmatmul.f32.gmra.mxu0 %v218
  %v376 = vpop.f32.mrf.mxu0
  %v377 = vadd.f32 %v188, %v376
  %378 = vmatmul.f32.gmra.mxu0 %v221
  %v379 = vpop.f32.mrf.mxu0
  %v380 = vadd.f32 %v188, %v379
  %381 = vmatmul.f32.gmra.mxu0 %v224
  %v382 = vpop.f32.mrf.mxu0
  %v383 = vadd.f32 %v188, %v382
  %384 = vmatmul.f32.gmra.mxu0 %v227
  %v385 = vpop.f32.mrf.mxu0
  %v386 = vadd.f32 %v188, %v385
  %387 = vdwg.mxu0
  %vm388 = vcmask 785408
  %v390 = vsel %vm388, %v35, 0
  %v393 = vsel %vm388, %v36, 0
  %v396 = vsel %vm388, %v37, 0
  %v399 = vsel %vm388, %v38, 0
  %v402 = vsel %vm388, %v39, 0
  %v405 = vsel %vm388, %v40, 0
  %v408 = vsel %vm388, %v41, 0
  %v411 = vsel %vm388, %v42, 0
  %v414 = vsel %vm388, %v43, 0
  %v417 = vsel %vm388, %v44, 0
  %v420 = vsel %vm388, %v45, 0
  %v423 = vsel %vm388, %v46, 0
  %425 = vmatpush.msra.mxu0 0.0
  %426 = vmatpush.msra.mxu0 0.0
  %427 = vmatpush.msra.mxu0 0.0
  %428 = vmatpush.msra.mxu0 0.0
  %429 = vmatpush.msra.mxu0 %v128
  %430 = vmatpush.msra.mxu0 %v127
  %431 = vmatpush.msra.mxu0 %v126
  %432 = vmatpush.msra.mxu0 %v125
  %433 = vmatpush.msra.mxu0 %v124
  %434 = vmatpush.msra.mxu0 %v123
  %435 = vmatpush.msra.mxu0 %v122
  %436 = vmatpush.msra.mxu0 %v121
  %437 = vmatpush.msra.mxu0 %v120
  %438 = vmatpush.msra.mxu0 %v119
  %439 = vmatpush.msra.mxu0 %v118
  %440 = vmatpush.msra.mxu0 %v117
  %441 = vmatmul.f32.gmra.mxu0 %v390
  %v442 = vpop.f32.mrf.mxu0
  %v443 = vadd.f32 0.0, %v442
  %444 = vmatmul.f32.gmra.mxu0 %v393
  %v445 = vpop.f32.mrf.mxu0
  %v446 = vadd.f32 0.0, %v445
  %447 = vmatmul.f32.gmra.mxu0 %v396
  %v448 = vpop.f32.mrf.mxu0
  %v449 = vadd.f32 0.0, %v448
  %450 = vmatmul.f32.gmra.mxu0 %v399
  %v451 = vpop.f32.mrf.mxu0
  %v452 = vadd.f32 0.0, %v451
  %453 = vmatmul.f32.gmra.mxu0 %v402
  %v454 = vpop.f32.mrf.mxu0
  %v455 = vadd.f32 0.0, %v454
  %456 = vmatmul.f32.gmra.mxu0 %v405
  %v457 = vpop.f32.mrf.mxu0
  %v458 = vadd.f32 0.0, %v457
  %459 = vmatmul.f32.gmra.mxu0 %v408
  %v460 = vpop.f32.mrf.mxu0
  %v461 = vadd.f32 0.0, %v460
  %462 = vmatmul.f32.gmra.mxu0 %v411
  %v463 = vpop.f32.mrf.mxu0
  %v464 = vadd.f32 0.0, %v463
  %465 = vmatmul.f32.gmra.mxu0 %v414
  %v466 = vpop.f32.mrf.mxu0
  %v467 = vadd.f32 0.0, %v466
  %468 = vmatmul.f32.gmra.mxu0 %v417
  %v469 = vpop.f32.mrf.mxu0
  %v470 = vadd.f32 0.0, %v469
  %471 = vmatmul.f32.gmra.mxu0 %v420
  %v472 = vpop.f32.mrf.mxu0
  %v473 = vadd.f32 0.0, %v472
  %474 = vmatmul.f32.gmra.mxu0 %v423
  %v475 = vpop.f32.mrf.mxu0
  %v476 = vadd.f32 0.0, %v475
  %477 = vdwg.mxu0
  %v479 = vsel %vm192, %v443, 0
  %v482 = vsel %vm192, %v446, 0
  %v485 = vsel %vm192, %v449, 0
  %v488 = vsel %vm192, %v452, 0
  %v491 = vsel %vm192, %v455, 0
  %v494 = vsel %vm192, %v458, 0
  %v497 = vsel %vm192, %v461, 0
  %v500 = vsel %vm192, %v464, 0
  %v503 = vsel %vm192, %v467, 0
  %v506 = vsel %vm192, %v470, 0
  %v509 = vsel %vm192, %v473, 0
  %v512 = vsel %vm192, %v476, 0
  %514 = vmatpush.msra.mxu0 0.0
  %515 = vmatpush.msra.mxu0 0.0
  %516 = vmatpush.msra.mxu0 0.0
  %517 = vmatpush.msra.mxu0 0.0
  %518 = vmatpush.msra.mxu0 0.0
  %519 = vmatpush.msra.mxu0 0.0
  %520 = vmatpush.msra.mxu0 0.0
  %521 = vmatpush.msra.mxu0 0.0
  %522 = vmatpush.msra.mxu0 0.0
  %523 = vmatpush.msra.mxu0 0.0
  %524 = vmatpush.msra.mxu0 0.0
  %525 = vmatpush.msra.mxu0 0.0
  %526 = vmatpush.msra.mxu0 %v149
  %527 = vmatpush.msra.mxu0 %v147
  %528 = vmatpush.msra.mxu0 %v145
  %529 = vmatpush.msra.mxu0 %v143
  %530 = vmatmul.f32.gmra.mxu0 %v479
  %v531 = vpop.f32.mrf.mxu0
  %v532 = vadd.f32 0.0, %v531
  %533 = vmatmul.f32.gmra.mxu0 %v482
  %v534 = vpop.f32.mrf.mxu0
  %v535 = vadd.f32 0.0, %v534
  %536 = vmatmul.f32.gmra.mxu0 %v485
  %v537 = vpop.f32.mrf.mxu0
  %v538 = vadd.f32 0.0, %v537
  %539 = vmatmul.f32.gmra.mxu0 %v488
  %v540 = vpop.f32.mrf.mxu0
  %v541 = vadd.f32 0.0, %v540
  %542 = vmatmul.f32.gmra.mxu0 %v491
  %v543 = vpop.f32.mrf.mxu0
  %v544 = vadd.f32 0.0, %v543
  %545 = vmatmul.f32.gmra.mxu0 %v494
  %v546 = vpop.f32.mrf.mxu0
  %v547 = vadd.f32 0.0, %v546
  %548 = vmatmul.f32.gmra.mxu0 %v497
  %v549 = vpop.f32.mrf.mxu0
  %v550 = vadd.f32 0.0, %v549
  %551 = vmatmul.f32.gmra.mxu0 %v500
  %v552 = vpop.f32.mrf.mxu0
  %v553 = vadd.f32 0.0, %v552
  %554 = vmatmul.f32.gmra.mxu0 %v503
  %v555 = vpop.f32.mrf.mxu0
  %v556 = vadd.f32 0.0, %v555
  %557 = vmatmul.f32.gmra.mxu0 %v506
  %v558 = vpop.f32.mrf.mxu0
  %v559 = vadd.f32 0.0, %v558
  %560 = vmatmul.f32.gmra.mxu0 %v509
  %v561 = vpop.f32.mrf.mxu0
  %v562 = vadd.f32 0.0, %v561
  %563 = vmatmul.f32.gmra.mxu0 %v512
  %v564 = vpop.f32.mrf.mxu0
  %v565 = vadd.f32 0.0, %v564
  %566 = vdwg.mxu0
  %567 = vmatpush.msra.mxu0 0.0
  %568 = vmatpush.msra.mxu0 0.0
  %569 = vmatpush.msra.mxu0 0.0
  %570 = vmatpush.msra.mxu0 0.0
  %571 = vmatpush.msra.mxu0 0.0
  %572 = vmatpush.msra.mxu0 0.0
  %573 = vmatpush.msra.mxu0 0.0
  %574 = vmatpush.msra.mxu0 0.0
  %575 = vmatpush.msra.mxu0 0.0
  %576 = vmatpush.msra.mxu0 0.0
  %577 = vmatpush.msra.mxu0 0.0
  %578 = vmatpush.msra.mxu0 0.0
  %579 = vmatpush.msra.mxu0 %v150
  %580 = vmatpush.msra.mxu0 %v148
  %581 = vmatpush.msra.mxu0 %v146
  %582 = vmatpush.msra.mxu0 %v144
  %583 = vmatmul.f32.gmra.mxu0 %v479
  %v584 = vpop.f32.mrf.mxu0
  %v585 = vadd.f32 0.0, %v584
  %586 = vmatmul.f32.gmra.mxu0 %v482
  %v587 = vpop.f32.mrf.mxu0
  %v588 = vadd.f32 0.0, %v587
  %589 = vmatmul.f32.gmra.mxu0 %v485
  %v590 = vpop.f32.mrf.mxu0
  %v591 = vadd.f32 0.0, %v590
  %592 = vmatmul.f32.gmra.mxu0 %v488
  %v593 = vpop.f32.mrf.mxu0
  %v594 = vadd.f32 0.0, %v593
  %595 = vmatmul.f32.gmra.mxu0 %v491
  %v596 = vpop.f32.mrf.mxu0
  %v597 = vadd.f32 0.0, %v596
  %598 = vmatmul.f32.gmra.mxu0 %v494
  %v599 = vpop.f32.mrf.mxu0
  %v600 = vadd.f32 0.0, %v599
  %601 = vmatmul.f32.gmra.mxu0 %v497
  %v602 = vpop.f32.mrf.mxu0
  %v603 = vadd.f32 0.0, %v602
  %604 = vmatmul.f32.gmra.mxu0 %v500
  %v605 = vpop.f32.mrf.mxu0
  %v606 = vadd.f32 0.0, %v605
  %607 = vmatmul.f32.gmra.mxu0 %v503
  %v608 = vpop.f32.mrf.mxu0
  %v609 = vadd.f32 0.0, %v608
  %610 = vmatmul.f32.gmra.mxu0 %v506
  %v611 = vpop.f32.mrf.mxu0
  %v612 = vadd.f32 0.0, %v611
  %613 = vmatmul.f32.gmra.mxu0 %v509
  %v614 = vpop.f32.mrf.mxu0
  %v615 = vadd.f32 0.0, %v614
  %616 = vmatmul.f32.gmra.mxu0 %v512
  %v617 = vpop.f32.mrf.mxu0
  %v618 = vadd.f32 0.0, %v617
  %619 = vdwg.mxu0
  %v620 = vadd.f32 %v247, %v532
  %v621 = vadd.f32 %v300, %v585
  %v622 = vadd.f32 %v250, %v535
  %v623 = vadd.f32 %v303, %v588
  %v624 = vadd.f32 %v253, %v538
  %v625 = vadd.f32 %v306, %v591
  %v626 = vadd.f32 %v256, %v541
  %v627 = vadd.f32 %v309, %v594
  %v628 = vadd.f32 %v259, %v544
  %v629 = vadd.f32 %v312, %v597
  %v630 = vadd.f32 %v262, %v547
  %v631 = vadd.f32 %v315, %v600
  %v632 = vadd.f32 %v265, %v550
  %v633 = vadd.f32 %v318, %v603
  %v634 = vadd.f32 %v268, %v553
  %v635 = vadd.f32 %v321, %v606
  %v636 = vadd.f32 %v271, %v556
  %v637 = vadd.f32 %v324, %v609
  %v638 = vadd.f32 %v274, %v559
  %v639 = vadd.f32 %v327, %v612
  %v640 = vadd.f32 %v277, %v562
  %v641 = vadd.f32 %v330, %v615
  %v642 = vadd.f32 %v280, %v565
  %v643 = vadd.f32 %v333, %v618
  %v645 = vperm.slane %v152, 0
  %v646 = vperm.slane %v152, 1
  %v649 = vmul.f32 %v645, 0.0
  %v650 = vmul.f32 %v646, 0.0
  %v651 = vadd.f32 %v649, %v620
  %v652 = vadd.f32 %v650, %v621
  %v653 = vadd.f32 %v649, %v622
  %v654 = vadd.f32 %v650, %v623
  %v655 = vmax.f32 %v651, 0.0
  %v656 = vmax.f32 %v652, 0.0
  %v657 = vmax.f32 %v653, 0.0
  %v658 = vmax.f32 %v654, 0.0
  %v659 = vpack.c.bf16 %v656, %v655
  %v660 = vpack.c.bf16 %v658, %v657
  %661 = vst [vmem:[#allocation2] sm:$0xff] %v659
  %662 = vst [vmem:[#allocation2 + $0x8] sm:$0xff] %v660
  %v663 = vmul.f32 %v645, %v651
  %v664 = vmul.f32 %v646, %v652
  %v665 = vmul.f32 %v645, %v653
  %v666 = vmul.f32 %v646, %v654
  %v667 = vadd.f32 %v663, %v624
  %v668 = vadd.f32 %v664, %v625
  %v669 = vadd.f32 %v665, %v626
  %v670 = vadd.f32 %v666, %v627
  %v671 = vmax.f32 %v667, 0.0
  %v672 = vmax.f32 %v668, 0.0
  %v673 = vmax.f32 %v669, 0.0
  %v674 = vmax.f32 %v670, 0.0
  %v675 = vpack.c.bf16 %v672, %v671
  %v676 = vpack.c.bf16 %v674, %v673
  %677 = vst [vmem:[#allocation2 + $0x10] sm:$0xff] %v675
  %678 = vst [vmem:[#allocation2 + $0x18] sm:$0xff] %v676
  %v679 = vmul.f32 %v645, %v667
  %v680 = vmul.f32 %v646, %v668
  %v681 = vmul.f32 %v645, %v669
  %v682 = vmul.f32 %v646, %v670
  %v683 = vadd.f32 %v679, %v628
  %v684 = vadd.f32 %v680, %v629
  %v685 = vadd.f32 %v681, %v630
  %v686 = vadd.f32 %v682, %v631
  %v687 = vmax.f32 %v683, 0.0
  %v688 = vmax.f32 %v684, 0.0
  %v689 = vmax.f32 %v685, 0.0
  %v690 = vmax.f32 %v686, 0.0
  %v691 = vpack.c.bf16 %v688, %v687
  %v692 = vpack.c.bf16 %v690, %v689
  %693 = vst [vmem:[#allocation2 + $0x20] sm:$0xff] %v691
  %694 = vst [vmem:[#allocation2 + $0x28] sm:$0xff] %v692
  %v695 = vmul.f32 %v645, %v683
  %v696 = vmul.f32 %v646, %v684
  %v697 = vmul.f32 %v645, %v685
  %v698 = vmul.f32 %v646, %v686
  %v699 = vadd.f32 %v695, %v632
  %v700 = vadd.f32 %v696, %v633
  %v701 = vadd.f32 %v697, %v634
  %v702 = vadd.f32 %v698, %v635
  %v703 = vmax.f32 %v699, 0.0
  %v704 = vmax.f32 %v700, 0.0
  %v705 = vmax.f32 %v701, 0.0
  %v706 = vmax.f32 %v702, 0.0
  %v707 = vpack.c.bf16 %v704, %v703
  %v708 = vpack.c.bf16 %v706, %v705
  %709 = vst [vmem:[#allocation2 + $0x30] sm:$0xff] %v707
  %710 = vst [vmem:[#allocation2 + $0x38] sm:$0xff] %v708
  %v711 = vmul.f32 %v645, %v699
  %v712 = vmul.f32 %v646, %v700
  %v713 = vmul.f32 %v645, %v701
  %v714 = vmul.f32 %v646, %v702
  %v715 = vadd.f32 %v711, %v636
  %v716 = vadd.f32 %v712, %v637
  %v717 = vadd.f32 %v713, %v638
  %v718 = vadd.f32 %v714, %v639
  %v719 = vmax.f32 %v715, 0.0
  %v720 = vmax.f32 %v716, 0.0
  %v721 = vmax.f32 %v717, 0.0
  %v722 = vmax.f32 %v718, 0.0
  %v723 = vpack.c.bf16 %v720, %v719
  %v724 = vpack.c.bf16 %v722, %v721
  %725 = vst [vmem:[#allocation2 + $0x40] sm:$0xff] %v723
  %726 = vst [vmem:[#allocation2 + $0x48] sm:$0xff] %v724
  %v727 = vmul.f32 %v645, %v715
  %v728 = vmul.f32 %v646, %v716
  %v729 = vmul.f32 %v645, %v717
  %v730 = vmul.f32 %v646, %v718
  %v731 = vadd.f32 %v727, %v640
  %v732 = vadd.f32 %v728, %v641
  %v733 = vadd.f32 %v729, %v642
  %v734 = vadd.f32 %v730, %v643
  %v735 = vmax.f32 %v731, 0.0
  %v736 = vmax.f32 %v732, 0.0
  %v737 = vmax.f32 %v733, 0.0
  %v738 = vmax.f32 %v734, 0.0
  %v739 = vpack.c.bf16 %v736, %v735
  %v740 = vpack.c.bf16 %v738, %v737
  %741 = vst [vmem:[#allocation2 + $0x50] sm:$0xff] %v739
  %742 = vst [vmem:[#allocation2 + $0x58] sm:$0xff] %v740
  %v743 = vld [vmem:[#allocation2] sm:$0xff]
  %v744 = vld [vmem:[#allocation2 + $0x8] sm:$0xff]
  %v745 = vld [vmem:[#allocation2 + $0x10] sm:$0xff]
  %v746 = vld [vmem:[#allocation2 + $0x18] sm:$0xff]
  %v747 = vld [vmem:[#allocation2 + $0x20] sm:$0xff]
  %v748 = vld [vmem:[#allocation2 + $0x28] sm:$0xff]
  %v749 = vld [vmem:[#allocation2 + $0x30] sm:$0xff]
  %v750 = vld [vmem:[#allocation2 + $0x38] sm:$0xff]
  %v751 = vld [vmem:[#allocation2 + $0x40] sm:$0xff]
  %v752 = vld [vmem:[#allocation2 + $0x48] sm:$0xff]
  %v753 = vld [vmem:[#allocation2 + $0x50] sm:$0xff]
  %v754 = vld [vmem:[#allocation2 + $0x58] sm:$0xff]
  %v755 = vperm.slane %v53, 0
  %v768 = vunpack.c.l.b16 %v743
  %v769 = vunpack.c.h.b16 %v743
  %v770 = vunpack.c.l.b16 %v744
  %v771 = vunpack.c.h.b16 %v744
  %v772 = vunpack.c.l.b16 %v745
  %v773 = vunpack.c.h.b16 %v745
  %v774 = vunpack.c.l.b16 %v746
  %v775 = vunpack.c.h.b16 %v746
  %v776 = vunpack.c.l.b16 %v747
  %v777 = vunpack.c.h.b16 %v747
  %v778 = vunpack.c.l.b16 %v748
  %v779 = vunpack.c.h.b16 %v748
  %v780 = vunpack.c.l.b16 %v749
  %v781 = vunpack.c.h.b16 %v749
  %v782 = vunpack.c.l.b16 %v750
  %v783 = vunpack.c.h.b16 %v750
  %v784 = vunpack.c.l.b16 %v751
  %v785 = vunpack.c.h.b16 %v751
  %v786 = vunpack.c.l.b16 %v752
  %v787 = vunpack.c.h.b16 %v752
  %v788 = vunpack.c.l.b16 %v753
  %v789 = vunpack.c.h.b16 %v753
  %v790 = vunpack.c.l.b16 %v754
  %v791 = vunpack.c.h.b16 %v754
  %v792 = vpack.c.b16 %v770, %v768
  %v793 = vpack.c.b16 %v771, %v769
  %v794 = vpack.c.b16 %v774, %v772
  %v795 = vpack.c.b16 %v775, %v773
  %v796 = vpack.c.b16 %v778, %v776
  %v797 = vpack.c.b16 %v779, %v777
  %v798 = vpack.c.b16 %v782, %v780
  %v799 = vpack.c.b16 %v783, %v781
  %v800 = vpack.c.b16 %v786, %v784
  %v801 = vpack.c.b16 %v787, %v785
  %v802 = vpack.c.b16 %v790, %v788
  %v803 = vpack.c.b16 %v791, %v789
  %v848 = vunpack.c.l.b16 %v153
  %v849 = vunpack.c.l.b16 %v154
  %v850 = vunpack.c.l.b16 %v155
  %v851 = vunpack.c.l.b16 %v156
  %v852 = vunpack.c.l.b16 %v157
  %v853 = vunpack.c.l.b16 %v158
  %v854 = vunpack.c.l.b16 %v159
  %v855 = vunpack.c.l.b16 %v160
  %v856 = vunpack.c.l.b16 %v161
  %v857 = vunpack.c.l.b16 %v162
  %v858 = vunpack.c.l.b16 %v163
  %v859 = vunpack.c.l.b16 %v164
  %v860 = vunpack.c.l.b16 %v165
  %v861 = vunpack.c.l.b16 %v166
  %v862 = vunpack.c.l.b16 %v167
  %v863 = vunpack.c.l.b16 %v168
  %v864 = vunpack.c.l.b16 %v169
  %v865 = vunpack.c.l.b16 %v170
  %v866 = vunpack.c.l.b16 %v171
  %v867 = vunpack.c.l.b16 %v172
  %v868 = vunpack.c.l.b16 %v173
  %v869 = vunpack.c.l.b16 %v174
  %v870 = vunpack.c.l.b16 %v175
  %v871 = vunpack.c.l.b16 %v176
  %v872 = vunpack.c.l.b16 %v177
  %v873 = vunpack.c.l.b16 %v178
  %v874 = vunpack.c.l.b16 %v179
  %v875 = vunpack.c.l.b16 %v180
  %v876 = vunpack.c.l.b16 %v181
  %v877 = vunpack.c.l.b16 %v182
  %v878 = vunpack.c.l.b16 %v183
  %v879 = vunpack.c.l.b16 %v184
  %v880 = vpack.c.b16 %v849, %v848
  %v881 = vpack.c.b16 %v851, %v850
  %v882 = vpack.c.b16 %v853, %v852
  %v883 = vpack.c.b16 %v855, %v854
  %v884 = vpack.c.b16 %v857, %v856
  %v885 = vpack.c.b16 %v859, %v858
  %v886 = vpack.c.b16 %v861, %v860
  %v887 = vpack.c.b16 %v863, %v862
  %v888 = vpack.c.b16 %v865, %v864
  %v889 = vpack.c.b16 %v867, %v866
  %v890 = vpack.c.b16 %v869, %v868
  %v891 = vpack.c.b16 %v871, %v870
  %v892 = vpack.c.b16 %v873, %v872
  %v893 = vpack.c.b16 %v875, %v874
  %v894 = vpack.c.b16 %v877, %v876
  %v895 = vpack.c.b16 %v879, %v878
  %912 = vmatpush.bf16.msra.mxu0 %v887
  %913 = vmatpush.bf16.msra.mxu0 %v886
  %914 = vmatpush.bf16.msra.mxu0 %v885
  %915 = vmatpush.bf16.msra.mxu0 %v884
  %916 = vmatpush.bf16.msra.mxu0 %v883
  %917 = vmatpush.bf16.msra.mxu0 %v882
  %918 = vmatpush.bf16.msra.mxu0 %v881
  %919 = vmatpush.bf16.msra.mxu0 %v880
  %920 = vmatmul.bf16.gmra.mxu0 %v792
  %v921 = vpop.f32.mrf.mxu0
  %v922 = vadd.f32 %v755, %v921
  %v923 = vpop.f32.mrf.mxu0
  %v924 = vadd.f32 %v755, %v923
  %925 = vmatmul.bf16.gmra.mxu0 %v794
  %v926 = vpop.f32.mrf.mxu0
  %v927 = vadd.f32 %v755, %v926
  %v928 = vpop.f32.mrf.mxu0
  %v929 = vadd.f32 %v755, %v928
  %930 = vmatmul.bf16.gmra.mxu0 %v796
  %v931 = vpop.f32.mrf.mxu0
  %v932 = vadd.f32 %v755, %v931
  %v933 = vpop.f32.mrf.mxu0
  %v934 = vadd.f32 %v755, %v933
  %935 = vmatmul.bf16.gmra.mxu0 %v798
  %v936 = vpop.f32.mrf.mxu0
  %v937 = vadd.f32 %v755, %v936
  %v938 = vpop.f32.mrf.mxu0
  %v939 = vadd.f32 %v755, %v938
  %940 = vmatmul.bf16.gmra.mxu0 %v800
  %v941 = vpop.f32.mrf.mxu0
  %v942 = vadd.f32 %v755, %v941
  %v943 = vpop.f32.mrf.mxu0
  %v944 = vadd.f32 %v755, %v943
  %945 = vmatmul.bf16.gmra.mxu0 %v802
  %v946 = vpop.f32.mrf.mxu0
  %v947 = vadd.f32 %v755, %v946
  %v948 = vpop.f32.mrf.mxu0
  %v949 = vadd.f32 %v755, %v948
  %950 = vdwg.mxu0
  %951 = vmatpush.bf16.msra.mxu0 %v895
  %952 = vmatpush.bf16.msra.mxu0 %v894
  %953 = vmatpush.bf16.msra.mxu0 %v893
  %954 = vmatpush.bf16.msra.mxu0 %v892
  %955 = vmatpush.bf16.msra.mxu0 %v891
  %956 = vmatpush.bf16.msra.mxu0 %v890
  %957 = vmatpush.bf16.msra.mxu0 %v889
  %958 = vmatpush.bf16.msra.mxu0 %v888
  %959 = vmatmul.bf16.gmra.mxu0 %v793
  %v960 = vpop.f32.mrf.mxu0
  %v961 = vadd.f32 %v922, %v960
  %v962 = vpop.f32.mrf.mxu0
  %v963 = vadd.f32 %v924, %v962
  %964 = vmatmul.bf16.gmra.mxu0 %v795
  %v965 = vpop.f32.mrf.mxu0
  %v966 = vadd.f32 %v927, %v965
  %v967 = vpop.f32.mrf.mxu0
  %v968 = vadd.f32 %v929, %v967
  %969 = vmatmul.bf16.gmra.mxu0 %v797
  %v970 = vpop.f32.mrf.mxu0
  %v971 = vadd.f32 %v932, %v970
  %v972 = vpop.f32.mrf.mxu0
  %v973 = vadd.f32 %v934, %v972
  %974 = vmatmul.bf16.gmra.mxu0 %v799
  %v975 = vpop.f32.mrf.mxu0
  %v976 = vadd.f32 %v937, %v975
  %v977 = vpop.f32.mrf.mxu0
  %v978 = vadd.f32 %v939, %v977
  %979 = vmatmul.bf16.gmra.mxu0 %v801
  %v980 = vpop.f32.mrf.mxu0
  %v981 = vadd.f32 %v942, %v980
  %v982 = vpop.f32.mrf.mxu0
  %v983 = vadd.f32 %v944, %v982
  %984 = vmatmul.bf16.gmra.mxu0 %v803
  %v985 = vpop.f32.mrf.mxu0
  %v986 = vadd.f32 %v947, %v985
  %v987 = vpop.f32.mrf.mxu0
  %v988 = vadd.f32 %v949, %v987
  %989 = vdwg.mxu0
  %v990 = vadd.f32 %v961, %v353
  %v991 = vadd.f32 %v963, %v356
  %v992 = vadd.f32 %v966, %v359
  %v993 = vadd.f32 %v968, %v362
  %v994 = vadd.f32 %v971, %v365
  %v995 = vadd.f32 %v973, %v368
  %v996 = vadd.f32 %v976, %v371
  %v997 = vadd.f32 %v978, %v374
  %v998 = vadd.f32 %v981, %v377
  %v999 = vadd.f32 %v983, %v380
  %v1000 = vadd.f32 %v986, %v383
  %v1001 = vadd.f32 %v988, %v386
  %v1002 = vld [vmem:[%s2 + $0x60] sm:$0xff]
  %v1003 = vld [vmem:[%s2 + $0x68] sm:$0xff]
  %v1004 = vld [vmem:[%s2 + $0x70] sm:$0xff]
  %v1005 = vld [vmem:[%s2 + $0x78] sm:$0xff]
  %v1006 = vld [vmem:[%s2 + $0x80] sm:$0xff]
  %v1007 = vld [vmem:[%s2 + $0x88] sm:$0xff]
  %v1008 = vld [vmem:[%s2 + $0x90] sm:$0xff]
  %v1009 = vld [vmem:[%s2 + $0x98] sm:$0xff]
  %v1010 = vld [vmem:[%s2 + $0xa0] sm:$0xff]
  %v1011 = vld [vmem:[%s2 + $0xa8] sm:$0xff]
  %v1012 = vld [vmem:[%s2 + $0xb0] sm:$0xff]
  %v1013 = vld [vmem:[%s2 + $0xb8] sm:$0xff]
  %s1014 = scalar_lea.vmem %s2, 216
  %v1015 = vld [vmem:[%s1014] ss:$8 sm:$0x7]
  %v1016 = vld [vmem:[%s3 + $0x40] sm:$0xff]
  %v1017 = vld [vmem:[%s3 + $0x48] sm:$0xff]
  %v1018 = vld [vmem:[%s3 + $0x50] sm:$0xff]
  %v1019 = vld [vmem:[%s3 + $0x58] sm:$0xff]
  %v1020 = vld [vmem:[%s3 + $0x60] sm:$0xff]
  %v1021 = vld [vmem:[%s3 + $0x68] sm:$0xff]
  %v1022 = vld [vmem:[%s3 + $0x70] sm:$0xff]
  %v1023 = vld [vmem:[%s3 + $0x78] sm:$0xff]
  %s1024 = scalar_lea.vmem %s3, 144
  %v1025 = vld [vmem:[%s1024] ss:$8 sm:$0x3]
  %v1026 = vld [vmem:[%s4 + $0x80] sm:$0xf]
  %v1027 = vld [vmem:[%s4 + $0x84] sm:$0xf]
  %v1028 = vld [vmem:[%s4 + $0x88] sm:$0xf]
  %v1029 = vld [vmem:[%s4 + $0x8c] sm:$0xf]
  %v1030 = vld [vmem:[%s4 + $0x90] sm:$0xf]
  %v1031 = vld [vmem:[%s4 + $0x94] sm:$0xf]
  %v1032 = vld [vmem:[%s4 + $0x98] sm:$0xf]
  %v1033 = vld [vmem:[%s4 + $0x9c] sm:$0xf]
  %v1034 = vld [vmem:[%s4 + $0xa0] sm:$0xf]
  %v1035 = vld [vmem:[%s4 + $0xa4] sm:$0xf]
  %v1036 = vld [vmem:[%s4 + $0xa8] sm:$0xf]
  %v1037 = vld [vmem:[%s4 + $0xac] sm:$0xf]
  %v1038 = vld [vmem:[%s4 + $0xb0] sm:$0xf]
  %v1039 = vld [vmem:[%s4 + $0xb4] sm:$0xf]
  %v1040 = vld [vmem:[%s4 + $0xb8] sm:$0xf]
  %v1041 = vld [vmem:[%s4 + $0xbc] sm:$0xf]
  %v1042 = vld [vmem:[%s4 + $0xc0] sm:$0xf]
  %v1043 = vld [vmem:[%s4 + $0xc4] sm:$0xf]
  %v1044 = vld [vmem:[%s4 + $0xc8] sm:$0xf]
  %v1045 = vld [vmem:[%s4 + $0xcc] sm:$0xf]
  %v1046 = vld [vmem:[%s4 + $0xd0] sm:$0xf]
  %v1047 = vld [vmem:[%s4 + $0xd4] sm:$0xf]
  %v1048 = vld [vmem:[%s4 + $0xd8] sm:$0xf]
  %v1049 = vld [vmem:[%s4 + $0xdc] sm:$0xf]
  %v1050 = vld [vmem:[%s4 + $0xe0] sm:$0xf]
  %v1051 = vld [vmem:[%s4 + $0xe4] sm:$0xf]
  %v1052 = vld [vmem:[%s4 + $0xe8] sm:$0xf]
  %v1053 = vld [vmem:[%s4 + $0xec] sm:$0xf]
  %v1054 = vld [vmem:[%s4 + $0xf0] sm:$0xf]
  %v1055 = vld [vmem:[%s4 + $0xf4] sm:$0xf]
  %v1056 = vld [vmem:[%s4 + $0xf8] sm:$0xf]
  %v1057 = vld [vmem:[%s4 + $0xfc] sm:$0xf]
  %v1059 = vperm.slane %v1015, 0
  %v1060 = vperm.slane %v1015, 1
  %v1061 = vperm.slane %v1015, 2
  %v1066 = vsel %vm192, %v990, 0
  %v1069 = vsel %vm192, %v991, 0
  %v1072 = vsel %vm192, %v992, 0
  %v1075 = vsel %vm192, %v993, 0
  %v1078 = vsel %vm192, %v994, 0
  %v1081 = vsel %vm192, %v995, 0
  %v1084 = vsel %vm192, %v996, 0
  %v1087 = vsel %vm192, %v997, 0
  %v1090 = vsel %vm192, %v998, 0
  %v1093 = vsel %vm192, %v999, 0
  %v1096 = vsel %vm192, %v1000, 0
  %v1099 = vsel %vm192, %v1001, 0
  %1101 = vmatpush.msra.mxu0 0.0
  %1102 = vmatpush.msra.mxu0 0.0
  %1103 = vmatpush.msra.mxu0 0.0
  %1104 = vmatpush.msra.mxu0 0.0
  %1105 = vmatpush.msra.mxu0 0.0
  %1106 = vmatpush.msra.mxu0 0.0
  %1107 = vmatpush.msra.mxu0 0.0
  %1108 = vmatpush.msra.mxu0 0.0
  %1109 = vmatpush.msra.mxu0 0.0
  %1110 = vmatpush.msra.mxu0 0.0
  %1111 = vmatpush.msra.mxu0 0.0
  %1112 = vmatpush.msra.mxu0 0.0
  %1113 = vmatpush.msra.mxu0 %v1011
  %1114 = vmatpush.msra.mxu0 %v1008
  %1115 = vmatpush.msra.mxu0 %v1005
  %1116 = vmatpush.msra.mxu0 %v1002
  %1117 = vmatmul.f32.gmra.mxu0 %v1066
  %v1118 = vpop.f32.mrf.mxu0
  %v1119 = vadd.f32 %v1059, %v1118
  %1120 = vmatmul.f32.gmra.mxu0 %v1069
  %v1121 = vpop.f32.mrf.mxu0
  %v1122 = vadd.f32 %v1059, %v1121
  %1123 = vmatmul.f32.gmra.mxu0 %v1072
  %v1124 = vpop.f32.mrf.mxu0
  %v1125 = vadd.f32 %v1059, %v1124
  %1126 = vmatmul.f32.gmra.mxu0 %v1075
  %v1127 = vpop.f32.mrf.mxu0
  %v1128 = vadd.f32 %v1059, %v1127
  %1129 = vmatmul.f32.gmra.mxu0 %v1078
  %v1130 = vpop.f32.mrf.mxu0
  %v1131 = vadd.f32 %v1059, %v1130
  %1132 = vmatmul.f32.gmra.mxu0 %v1081
  %v1133 = vpop.f32.mrf.mxu0
  %v1134 = vadd.f32 %v1059, %v1133
  %1135 = vmatmul.f32.gmra.mxu0 %v1084
  %v1136 = vpop.f32.mrf.mxu0
  %v1137 = vadd.f32 %v1059, %v1136
  %1138 = vmatmul.f32.gmra.mxu0 %v1087
  %v1139 = vpop.f32.mrf.mxu0
  %v1140 = vadd.f32 %v1059, %v1139
  %1141 = vmatmul.f32.gmra.mxu0 %v1090
  %v1142 = vpop.f32.mrf.mxu0
  %v1143 = vadd.f32 %v1059, %v1142
  %1144 = vmatmul.f32.gmra.mxu0 %v1093
  %v1145 = vpop.f32.mrf.mxu0
  %v1146 = vadd.f32 %v1059, %v1145
  %1147 = vmatmul.f32.gmra.mxu0 %v1096
  %v1148 = vpop.f32.mrf.mxu0
  %v1149 = vadd.f32 %v1059, %v1148
  %1150 = vmatmul.f32.gmra.mxu0 %v1099
  %v1151 = vpop.f32.mrf.mxu0
  %v1152 = vadd.f32 %v1059, %v1151
  %1153 = vdwg.mxu0
  %1154 = vmatpush.msra.mxu0 0.0
  %1155 = vmatpush.msra.mxu0 0.0
  %1156 = vmatpush.msra.mxu0 0.0
  %1157 = vmatpush.msra.mxu0 0.0
  %1158 = vmatpush.msra.mxu0 0.0
  %1159 = vmatpush.msra.mxu0 0.0
  %1160 = vmatpush.msra.mxu0 0.0
  %1161 = vmatpush.msra.mxu0 0.0
  %1162 = vmatpush.msra.mxu0 0.0
  %1163 = vmatpush.msra.mxu0 0.0
  %1164 = vmatpush.msra.mxu0 0.0
  %1165 = vmatpush.msra.mxu0 0.0
  %1166 = vmatpush.msra.mxu0 %v1012
  %1167 = vmatpush.msra.mxu0 %v1009
  %1168 = vmatpush.msra.mxu0 %v1006
  %1169 = vmatpush.msra.mxu0 %v1003
  %1170 = vmatmul.f32.gmra.mxu0 %v1066
  %v1171 = vpop.f32.mrf.mxu0
  %v1172 = vadd.f32 %v1060, %v1171
  %1173 = vmatmul.f32.gmra.mxu0 %v1069
  %v1174 = vpop.f32.mrf.mxu0
  %v1175 = vadd.f32 %v1060, %v1174
  %1176 = vmatmul.f32.gmra.mxu0 %v1072
  %v1177 = vpop.f32.mrf.mxu0
  %v1178 = vadd.f32 %v1060, %v1177
  %1179 = vmatmul.f32.gmra.mxu0 %v1075
  %v1180 = vpop.f32.mrf.mxu0
  %v1181 = vadd.f32 %v1060, %v1180
  %1182 = vmatmul.f32.gmra.mxu0 %v1078
  %v1183 = vpop.f32.mrf.mxu0
  %v1184 = vadd.f32 %v1060, %v1183
  %1185 = vmatmul.f32.gmra.mxu0 %v1081
  %v1186 = vpop.f32.mrf.mxu0
  %v1187 = vadd.f32 %v1060, %v1186
  %1188 = vmatmul.f32.gmra.mxu0 %v1084
  %v1189 = vpop.f32.mrf.mxu0
  %v1190 = vadd.f32 %v1060, %v1189
  %1191 = vmatmul.f32.gmra.mxu0 %v1087
  %v1192 = vpop.f32.mrf.mxu0
  %v1193 = vadd.f32 %v1060, %v1192
  %1194 = vmatmul.f32.gmra.mxu0 %v1090
  %v1195 = vpop.f32.mrf.mxu0
  %v1196 = vadd.f32 %v1060, %v1195
  %1197 = vmatmul.f32.gmra.mxu0 %v1093
  %v1198 = vpop.f32.mrf.mxu0
  %v1199 = vadd.f32 %v1060, %v1198
  %1200 = vmatmul.f32.gmra.mxu0 %v1096
  %v1201 = vpop.f32.mrf.mxu0
  %v1202 = vadd.f32 %v1060, %v1201
  %1203 = vmatmul.f32.gmra.mxu0 %v1099
  %v1204 = vpop.f32.mrf.mxu0
  %v1205 = vadd.f32 %v1060, %v1204
  %1206 = vdwg.mxu0
  %1207 = vmatpush.msra.mxu0 0.0
  %1208 = vmatpush.msra.mxu0 0.0
  %1209 = vmatpush.msra.mxu0 0.0
  %1210 = vmatpush.msra.mxu0 0.0
  %1211 = vmatpush.msra.mxu0 0.0
  %1212 = vmatpush.msra.mxu0 0.0
  %1213 = vmatpush.msra.mxu0 0.0
  %1214 = vmatpush.msra.mxu0 0.0
  %1215 = vmatpush.msra.mxu0 0.0
  %1216 = vmatpush.msra.mxu0 0.0
  %1217 = vmatpush.msra.mxu0 0.0
  %1218 = vmatpush.msra.mxu0 0.0
  %1219 = vmatpush.msra.mxu0 %v1013
  %1220 = vmatpush.msra.mxu0 %v1010
  %1221 = vmatpush.msra.mxu0 %v1007
  %1222 = vmatpush.msra.mxu0 %v1004
  %1223 = vmatmul.f32.gmra.mxu0 %v1066
  %v1224 = vpop.f32.mrf.mxu0
  %1225 = vmatmul.f32.gmra.mxu0 %v1069
  %v1226 = vpop.f32.mrf.mxu0
  %1227 = vmatmul.f32.gmra.mxu0 %v1072
  %v1228 = vpop.f32.mrf.mxu0
  %1229 = vmatmul.f32.gmra.mxu0 %v1075
  %v1230 = vpop.f32.mrf.mxu0
  %1231 = vmatmul.f32.gmra.mxu0 %v1078
  %v1232 = vpop.f32.mrf.mxu0
  %1233 = vmatmul.f32.gmra.mxu0 %v1081
  %v1234 = vpop.f32.mrf.mxu0
  %1235 = vmatmul.f32.gmra.mxu0 %v1084
  %v1236 = vpop.f32.mrf.mxu0
  %1237 = vmatmul.f32.gmra.mxu0 %v1087
  %v1238 = vpop.f32.mrf.mxu0
  %1239 = vmatmul.f32.gmra.mxu0 %v1090
  %v1240 = vpop.f32.mrf.mxu0
  %1241 = vmatmul.f32.gmra.mxu0 %v1093
  %v1242 = vpop.f32.mrf.mxu0
  %1243 = vmatmul.f32.gmra.mxu0 %v1096
  %v1244 = vpop.f32.mrf.mxu0
  %v1245 = vadd.f32 %v1061, %v1244
  %1246 = vmatmul.f32.gmra.mxu0 %v1099
  %v1247 = vpop.f32.mrf.mxu0
  %v1248 = vadd.f32 %v1061, %v1247
  %1249 = vdwg.mxu0
  %1250 = vmatpush.msra.mxu0 0.0
  %1251 = vmatpush.msra.mxu0 0.0
  %1252 = vmatpush.msra.mxu0 0.0
  %1253 = vmatpush.msra.mxu0 0.0
  %1254 = vmatpush.msra.mxu0 %v1001
  %1255 = vmatpush.msra.mxu0 %v1000
  %1256 = vmatpush.msra.mxu0 %v999
  %1257 = vmatpush.msra.mxu0 %v998
  %1258 = vmatpush.msra.mxu0 %v997
  %1259 = vmatpush.msra.mxu0 %v996
  %1260 = vmatpush.msra.mxu0 %v995
  %1261 = vmatpush.msra.mxu0 %v994
  %1262 = vmatpush.msra.mxu0 %v993
  %1263 = vmatpush.msra.mxu0 %v992
  %1264 = vmatpush.msra.mxu0 %v991
  %1265 = vmatpush.msra.mxu0 %v990
  %1266 = vmatmul.f32.gmra.mxu0 %v390
  %v1267 = vpop.f32.mrf.mxu0
  %v1268 = vadd.f32 0.0, %v1267
  %1269 = vmatmul.f32.gmra.mxu0 %v393
  %v1270 = vpop.f32.mrf.mxu0
  %v1271 = vadd.f32 0.0, %v1270
  %1272 = vmatmul.f32.gmra.mxu0 %v396
  %v1273 = vpop.f32.mrf.mxu0
  %v1274 = vadd.f32 0.0, %v1273
  %1275 = vmatmul.f32.gmra.mxu0 %v399
  %v1276 = vpop.f32.mrf.mxu0
  %v1277 = vadd.f32 0.0, %v1276
  %1278 = vmatmul.f32.gmra.mxu0 %v402
  %v1279 = vpop.f32.mrf.mxu0
  %v1280 = vadd.f32 0.0, %v1279
  %1281 = vmatmul.f32.gmra.mxu0 %v405
  %v1282 = vpop.f32.mrf.mxu0
  %v1283 = vadd.f32 0.0, %v1282
  %1284 = vmatmul.f32.gmra.mxu0 %v408
  %v1285 = vpop.f32.mrf.mxu0
  %v1286 = vadd.f32 0.0, %v1285
  %1287 = vmatmul.f32.gmra.mxu0 %v411
  %v1288 = vpop.f32.mrf.mxu0
  %v1289 = vadd.f32 0.0, %v1288
  %1290 = vmatmul.f32.gmra.mxu0 %v414
  %v1291 = vpop.f32.mrf.mxu0
  %v1292 = vadd.f32 0.0, %v1291
  %1293 = vmatmul.f32.gmra.mxu0 %v417
  %v1294 = vpop.f32.mrf.mxu0
  %v1295 = vadd.f32 0.0, %v1294
  %1296 = vmatmul.f32.gmra.mxu0 %v420
  %v1297 = vpop.f32.mrf.mxu0
  %v1298 = vadd.f32 0.0, %v1297
  %1299 = vmatmul.f32.gmra.mxu0 %v423
  %v1300 = vpop.f32.mrf.mxu0
  %v1301 = vadd.f32 0.0, %v1300
  %1302 = vdwg.mxu0
  %v1304 = vsel %vm192, %v1268, 0
  %v1307 = vsel %vm192, %v1271, 0
  %v1310 = vsel %vm192, %v1274, 0
  %v1313 = vsel %vm192, %v1277, 0
  %v1316 = vsel %vm192, %v1280, 0
  %v1319 = vsel %vm192, %v1283, 0
  %v1322 = vsel %vm192, %v1286, 0
  %v1325 = vsel %vm192, %v1289, 0
  %v1328 = vsel %vm192, %v1292, 0
  %v1331 = vsel %vm192, %v1295, 0
  %v1334 = vsel %vm192, %v1298, 0
  %v1337 = vsel %vm192, %v1301, 0
  %1339 = vmatpush.msra.mxu0 0.0
  %1340 = vmatpush.msra.mxu0 0.0
  %1341 = vmatpush.msra.mxu0 0.0
  %1342 = vmatpush.msra.mxu0 0.0
  %1343 = vmatpush.msra.mxu0 0.0
  %1344 = vmatpush.msra.mxu0 0.0
  %1345 = vmatpush.msra.mxu0 0.0
  %1346 = vmatpush.msra.mxu0 0.0
  %1347 = vmatpush.msra.mxu0 0.0
  %1348 = vmatpush.msra.mxu0 0.0
  %1349 = vmatpush.msra.mxu0 0.0
  %1350 = vmatpush.msra.mxu0 0.0
  %1351 = vmatpush.msra.mxu0 %v1022
  %1352 = vmatpush.msra.mxu0 %v1020
  %1353 = vmatpush.msra.mxu0 %v1018
  %1354 = vmatpush.msra.mxu0 %v1016
  %1355 = vmatmul.f32.gmra.mxu0 %v1304
  %v1356 = vpop.f32.mrf.mxu0
  %v1357 = vadd.f32 0.0, %v1356
  %1358 = vmatmul.f32.gmra.mxu0 %v1307
  %v1359 = vpop.f32.mrf.mxu0
  %v1360 = vadd.f32 0.0, %v1359
  %1361 = vmatmul.f32.gmra.mxu0 %v1310
  %v1362 = vpop.f32.mrf.mxu0
  %v1363 = vadd.f32 0.0, %v1362
  %1364 = vmatmul.f32.gmra.mxu0 %v1313
  %v1365 = vpop.f32.mrf.mxu0
  %v1366 = vadd.f32 0.0, %v1365
  %1367 = vmatmul.f32.gmra.mxu0 %v1316
  %v1368 = vpop.f32.mrf.mxu0
  %v1369 = vadd.f32 0.0, %v1368
  %1370 = vmatmul.f32.gmra.mxu0 %v1319
  %v1371 = vpop.f32.mrf.mxu0
  %v1372 = vadd.f32 0.0, %v1371
  %1373 = vmatmul.f32.gmra.mxu0 %v1322
  %v1374 = vpop.f32.mrf.mxu0
  %v1375 = vadd.f32 0.0, %v1374
  %1376 = vmatmul.f32.gmra.mxu0 %v1325
  %v1377 = vpop.f32.mrf.mxu0
  %v1378 = vadd.f32 0.0, %v1377
  %1379 = vmatmul.f32.gmra.mxu0 %v1328
  %v1380 = vpop.f32.mrf.mxu0
  %v1381 = vadd.f32 0.0, %v1380
  %1382 = vmatmul.f32.gmra.mxu0 %v1331
  %v1383 = vpop.f32.mrf.mxu0
  %v1384 = vadd.f32 0.0, %v1383
  %1385 = vmatmul.f32.gmra.mxu0 %v1334
  %v1386 = vpop.f32.mrf.mxu0
  %v1387 = vadd.f32 0.0, %v1386
  %1388 = vmatmul.f32.gmra.mxu0 %v1337
  %v1389 = vpop.f32.mrf.mxu0
  %v1390 = vadd.f32 0.0, %v1389
  %1391 = vdwg.mxu0
  %1392 = vmatpush.msra.mxu0 0.0
  %1393 = vmatpush.msra.mxu0 0.0
  %1394 = vmatpush.msra.mxu0 0.0
  %1395 = vmatpush.msra.mxu0 0.0
  %1396 = vmatpush.msra.mxu0 0.0
  %1397 = vmatpush.msra.mxu0 0.0
  %1398 = vmatpush.msra.mxu0 0.0
  %1399 = vmatpush.msra.mxu0 0.0
  %1400 = vmatpush.msra.mxu0 0.0
  %1401 = vmatpush.msra.mxu0 0.0
  %1402 = vmatpush.msra.mxu0 0.0
  %1403 = vmatpush.msra.mxu0 0.0
  %1404 = vmatpush.msra.mxu0 %v1023
  %1405 = vmatpush.msra.mxu0 %v1021
  %1406 = vmatpush.msra.mxu0 %v1019
  %1407 = vmatpush.msra.mxu0 %v1017
  %1408 = vmatmul.f32.gmra.mxu0 %v1304
  %v1409 = vpop.f32.mrf.mxu0
  %v1410 = vadd.f32 0.0, %v1409
  %1411 = vmatmul.f32.gmra.mxu0 %v1307
  %v1412 = vpop.f32.mrf.mxu0
  %v1413 = vadd.f32 0.0, %v1412
  %1414 = vmatmul.f32.gmra.mxu0 %v1310
  %v1415 = vpop.f32.mrf.mxu0
  %v1416 = vadd.f32 0.0, %v1415
  %1417 = vmatmul.f32.gmra.mxu0 %v1313
  %v1418 = vpop.f32.mrf.mxu0
  %v1419 = vadd.f32 0.0, %v1418
  %1420 = vmatmul.f32.gmra.mxu0 %v1316
  %v1421 = vpop.f32.mrf.mxu0
  %v1422 = vadd.f32 0.0, %v1421
  %1423 = vmatmul.f32.gmra.mxu0 %v1319
  %v1424 = vpop.f32.mrf.mxu0
  %v1425 = vadd.f32 0.0, %v1424
  %1426 = vmatmul.f32.gmra.mxu0 %v1322
  %v1427 = vpop.f32.mrf.mxu0
  %v1428 = vadd.f32 0.0, %v1427
  %1429 = vmatmul.f32.gmra.mxu0 %v1325
  %v1430 = vpop.f32.mrf.mxu0
  %v1431 = vadd.f32 0.0, %v1430
  %1432 = vmatmul.f32.gmra.mxu0 %v1328
  %v1433 = vpop.f32.mrf.mxu0
  %v1434 = vadd.f32 0.0, %v1433
  %1435 = vmatmul.f32.gmra.mxu0 %v1331
  %v1436 = vpop.f32.mrf.mxu0
  %v1437 = vadd.f32 0.0, %v1436
  %1438 = vmatmul.f32.gmra.mxu0 %v1334
  %v1439 = vpop.f32.mrf.mxu0
  %v1440 = vadd.f32 0.0, %v1439
  %1441 = vmatmul.f32.gmra.mxu0 %v1337
  %v1442 = vpop.f32.mrf.mxu0
  %v1443 = vadd.f32 0.0, %v1442
  %1444 = vdwg.mxu0
  %v1445 = vadd.f32 %v1119, %v1357
  %v1446 = vadd.f32 %v1172, %v1410
  %v1447 = vadd.f32 %v1122, %v1360
  %v1448 = vadd.f32 %v1175, %v1413
  %v1449 = vadd.f32 %v1125, %v1363
  %v1450 = vadd.f32 %v1178, %v1416
  %v1451 = vadd.f32 %v1128, %v1366
  %v1452 = vadd.f32 %v1181, %v1419
  %v1453 = vadd.f32 %v1131, %v1369
  %v1454 = vadd.f32 %v1184, %v1422
  %v1455 = vadd.f32 %v1134, %v1372
  %v1456 = vadd.f32 %v1187, %v1425
  %v1457 = vadd.f32 %v1137, %v1375
  %v1458 = vadd.f32 %v1190, %v1428
  %v1459 = vadd.f32 %v1140, %v1378
  %v1460 = vadd.f32 %v1193, %v1431
  %v1461 = vadd.f32 %v1143, %v1381
  %v1462 = vadd.f32 %v1196, %v1434
  %v1463 = vadd.f32 %v1146, %v1384
  %v1464 = vadd.f32 %v1199, %v1437
  %v1465 = vadd.f32 %v1149, %v1387
  %v1466 = vadd.f32 %v1202, %v1440
  %v1467 = vadd.f32 %v1152, %v1390
  %v1468 = vadd.f32 %v1205, %v1443
  %v1470 = vperm.slane %v1025, 0
  %v1471 = vperm.slane %v1025, 1
  %v1474 = vmul.f32 %v1470, 0.0
  %v1475 = vmul.f32 %v1471, 0.0
  %v1476 = vadd.f32 %v1474, %v1445
  %v1477 = vadd.f32 %v1475, %v1446
  %v1478 = vadd.f32 %v1474, %v1447
  %v1479 = vadd.f32 %v1475, %v1448
  %v1480 = vmax.f32 %v1476, 0.0
  %v1481 = vmax.f32 %v1477, 0.0
  %v1482 = vmax.f32 %v1478, 0.0
  %v1483 = vmax.f32 %v1479, 0.0
  %v1484 = vpack.c.bf16 %v1481, %v1480
  %v1485 = vpack.c.bf16 %v1483, %v1482
  %1486 = vst [vmem:[#allocation2] sm:$0xff] %v1484
  %1487 = vst [vmem:[#allocation2 + $0x8] sm:$0xff] %v1485
  %v1488 = vmul.f32 %v1470, %v1476
  %v1489 = vmul.f32 %v1471, %v1477
  %v1490 = vmul.f32 %v1470, %v1478
  %v1491 = vmul.f32 %v1471, %v1479
  %v1492 = vadd.f32 %v1488, %v1449
  %v1493 = vadd.f32 %v1489, %v1450
  %v1494 = vadd.f32 %v1490, %v1451
  %v1495 = vadd.f32 %v1491, %v1452
  %v1496 = vmax.f32 %v1492, 0.0
  %v1497 = vmax.f32 %v1493, 0.0
  %v1498 = vmax.f32 %v1494, 0.0
  %v1499 = vmax.f32 %v1495, 0.0
  %v1500 = vpack.c.bf16 %v1497, %v1496
  %v1501 = vpack.c.bf16 %v1499, %v1498
  %1502 = vst [vmem:[#allocation2 + $0x10] sm:$0xff] %v1500
  %1503 = vst [vmem:[#allocation2 + $0x18] sm:$0xff] %v1501
  %v1504 = vmul.f32 %v1470, %v1492
  %v1505 = vmul.f32 %v1471, %v1493
  %v1506 = vmul.f32 %v1470, %v1494
  %v1507 = vmul.f32 %v1471, %v1495
  %v1508 = vadd.f32 %v1504, %v1453
  %v1509 = vadd.f32 %v1505, %v1454
  %v1510 = vadd.f32 %v1506, %v1455
  %v1511 = vadd.f32 %v1507, %v1456
  %v1512 = vmax.f32 %v1508, 0.0
  %v1513 = vmax.f32 %v1509, 0.0
  %v1514 = vmax.f32 %v1510, 0.0
  %v1515 = vmax.f32 %v1511, 0.0
  %v1516 = vpack.c.bf16 %v1513, %v1512
  %v1517 = vpack.c.bf16 %v1515, %v1514
  %1518 = vst [vmem:[#allocation2 + $0x20] sm:$0xff] %v1516
  %1519 = vst [vmem:[#allocation2 + $0x28] sm:$0xff] %v1517
  %v1520 = vmul.f32 %v1470, %v1508
  %v1521 = vmul.f32 %v1471, %v1509
  %v1522 = vmul.f32 %v1470, %v1510
  %v1523 = vmul.f32 %v1471, %v1511
  %v1524 = vadd.f32 %v1520, %v1457
  %v1525 = vadd.f32 %v1521, %v1458
  %v1526 = vadd.f32 %v1522, %v1459
  %v1527 = vadd.f32 %v1523, %v1460
  %v1528 = vmax.f32 %v1524, 0.0
  %v1529 = vmax.f32 %v1525, 0.0
  %v1530 = vmax.f32 %v1526, 0.0
  %v1531 = vmax.f32 %v1527, 0.0
  %v1532 = vpack.c.bf16 %v1529, %v1528
  %v1533 = vpack.c.bf16 %v1531, %v1530
  %1534 = vst [vmem:[#allocation2 + $0x30] sm:$0xff] %v1532
  %1535 = vst [vmem:[#allocation2 + $0x38] sm:$0xff] %v1533
  %v1536 = vmul.f32 %v1470, %v1524
  %v1537 = vmul.f32 %v1471, %v1525
  %v1538 = vmul.f32 %v1470, %v1526
  %v1539 = vmul.f32 %v1471, %v1527
  %v1540 = vadd.f32 %v1536, %v1461
  %v1541 = vadd.f32 %v1537, %v1462
  %v1542 = vadd.f32 %v1538, %v1463
  %v1543 = vadd.f32 %v1539, %v1464
  %v1544 = vmax.f32 %v1540, 0.0
  %v1545 = vmax.f32 %v1541, 0.0
  %v1546 = vmax.f32 %v1542, 0.0
  %v1547 = vmax.f32 %v1543, 0.0
  %v1548 = vpack.c.bf16 %v1545, %v1544
  %v1549 = vpack.c.bf16 %v1547, %v1546
  %1550 = vst [vmem:[#allocation2 + $0x40] sm:$0xff] %v1548
  %1551 = vst [vmem:[#allocation2 + $0x48] sm:$0xff] %v1549
  %v1552 = vmul.f32 %v1470, %v1540
  %v1553 = vmul.f32 %v1471, %v1541
  %v1554 = vmul.f32 %v1470, %v1542
  %v1555 = vmul.f32 %v1471, %v1543
  %v1556 = vadd.f32 %v1552, %v1465
  %v1557 = vadd.f32 %v1553, %v1466
  %v1558 = vadd.f32 %v1554, %v1467
  %v1559 = vadd.f32 %v1555, %v1468
  %v1560 = vmax.f32 %v1556, 0.0
  %v1561 = vmax.f32 %v1557, 0.0
  %v1562 = vmax.f32 %v1558, 0.0
  %v1563 = vmax.f32 %v1559, 0.0
  %v1564 = vpack.c.bf16 %v1561, %v1560
  %v1565 = vpack.c.bf16 %v1563, %v1562
  %1566 = vst [vmem:[#allocation2 + $0x50] sm:$0xff] %v1564
  %1567 = vst [vmem:[#allocation2 + $0x58] sm:$0xff] %v1565
  %v1568 = vld [vmem:[#allocation2] sm:$0xff]
  %v1569 = vld [vmem:[#allocation2 + $0x8] sm:$0xff]
  %v1570 = vld [vmem:[#allocation2 + $0x10] sm:$0xff]
  %v1571 = vld [vmem:[#allocation2 + $0x18] sm:$0xff]
  %v1572 = vld [vmem:[#allocation2 + $0x20] sm:$0xff]
  %v1573 = vld [vmem:[#allocation2 + $0x28] sm:$0xff]
  %v1574 = vld [vmem:[#allocation2 + $0x30] sm:$0xff]
  %v1575 = vld [vmem:[#allocation2 + $0x38] sm:$0xff]
  %v1576 = vld [vmem:[#allocation2 + $0x40] sm:$0xff]
  %v1577 = vld [vmem:[#allocation2 + $0x48] sm:$0xff]
  %v1578 = vld [vmem:[#allocation2 + $0x50] sm:$0xff]
  %v1579 = vld [vmem:[#allocation2 + $0x58] sm:$0xff]
  %v1580 = vperm.slane %v54, 0
  %v1593 = vunpack.c.l.b16 %v1568
  %v1594 = vunpack.c.h.b16 %v1568
  %v1595 = vunpack.c.l.b16 %v1569
  %v1596 = vunpack.c.h.b16 %v1569
  %v1597 = vunpack.c.l.b16 %v1570
  %v1598 = vunpack.c.h.b16 %v1570
  %v1599 = vunpack.c.l.b16 %v1571
  %v1600 = vunpack.c.h.b16 %v1571
  %v1601 = vunpack.c.l.b16 %v1572
  %v1602 = vunpack.c.h.b16 %v1572
  %v1603 = vunpack.c.l.b16 %v1573
  %v1604 = vunpack.c.h.b16 %v1573
  %v1605 = vunpack.c.l.b16 %v1574
  %v1606 = vunpack.c.h.b16 %v1574
  %v1607 = vunpack.c.l.b16 %v1575
  %v1608 = vunpack.c.h.b16 %v1575
  %v1609 = vunpack.c.l.b16 %v1576
  %v1610 = vunpack.c.h.b16 %v1576
  %v1611 = vunpack.c.l.b16 %v1577
  %v1612 = vunpack.c.h.b16 %v1577
  %v1613 = vunpack.c.l.b16 %v1578
  %v1614 = vunpack.c.h.b16 %v1578
  %v1615 = vunpack.c.l.b16 %v1579
  %v1616 = vunpack.c.h.b16 %v1579
  %v1617 = vpack.c.b16 %v1595, %v1593
  %v1618 = vpack.c.b16 %v1596, %v1594
  %v1619 = vpack.c.b16 %v1599, %v1597
  %v1620 = vpack.c.b16 %v1600, %v1598
  %v1621 = vpack.c.b16 %v1603, %v1601
  %v1622 = vpack.c.b16 %v1604, %v1602
  %v1623 = vpack.c.b16 %v1607, %v1605
  %v1624 = vpack.c.b16 %v1608, %v1606
  %v1625 = vpack.c.b16 %v1611, %v1609
  %v1626 = vpack.c.b16 %v1612, %v1610
  %v1627 = vpack.c.b16 %v1615, %v1613
  %v1628 = vpack.c.b16 %v1616, %v1614
  %v1673 = vunpack.c.l.b16 %v1026
  %v1674 = vunpack.c.l.b16 %v1027
  %v1675 = vunpack.c.l.b16 %v1028
  %v1676 = vunpack.c.l.b16 %v1029
  %v1677 = vunpack.c.l.b16 %v1030
  %v1678 = vunpack.c.l.b16 %v1031
  %v1679 = vunpack.c.l.b16 %v1032
  %v1680 = vunpack.c.l.b16 %v1033
  %v1681 = vunpack.c.l.b16 %v1034
  %v1682 = vunpack.c.l.b16 %v1035
  %v1683 = vunpack.c.l.b16 %v1036
  %v1684 = vunpack.c.l.b16 %v1037
  %v1685 = vunpack.c.l.b16 %v1038
  %v1686 = vunpack.c.l.b16 %v1039
  %v1687 = vunpack.c.l.b16 %v1040
  %v1688 = vunpack.c.l.b16 %v1041
  %v1689 = vunpack.c.l.b16 %v1042
  %v1690 = vunpack.c.l.b16 %v1043
  %v1691 = vunpack.c.l.b16 %v1044
  %v1692 = vunpack.c.l.b16 %v1045
  %v1693 = vunpack.c.l.b16 %v1046
  %v1694 = vunpack.c.l.b16 %v1047
  %v1695 = vunpack.c.l.b16 %v1048
  %v1696 = vunpack.c.l.b16 %v1049
  %v1697 = vunpack.c.l.b16 %v1050
  %v1698 = vunpack.c.l.b16 %v1051
  %v1699 = vunpack.c.l.b16 %v1052
  %v1700 = vunpack.c.l.b16 %v1053
  %v1701 = vunpack.c.l.b16 %v1054
  %v1702 = vunpack.c.l.b16 %v1055
  %v1703 = vunpack.c.l.b16 %v1056
  %v1704 = vunpack.c.l.b16 %v1057
  %v1705 = vpack.c.b16 %v1674, %v1673
  %v1706 = vpack.c.b16 %v1676, %v1675
  %v1707 = vpack.c.b16 %v1678, %v1677
  %v1708 = vpack.c.b16 %v1680, %v1679
  %v1709 = vpack.c.b16 %v1682, %v1681
  %v1710 = vpack.c.b16 %v1684, %v1683
  %v1711 = vpack.c.b16 %v1686, %v1685
  %v1712 = vpack.c.b16 %v1688, %v1687
  %v1713 = vpack.c.b16 %v1690, %v1689
  %v1714 = vpack.c.b16 %v1692, %v1691
  %v1715 = vpack.c.b16 %v1694, %v1693
  %v1716 = vpack.c.b16 %v1696, %v1695
  %v1717 = vpack.c.b16 %v1698, %v1697
  %v1718 = vpack.c.b16 %v1700, %v1699
  %v1719 = vpack.c.b16 %v1702, %v1701
  %v1720 = vpack.c.b16 %v1704, %v1703
  %1737 = vmatpush.bf16.msra.mxu0 %v1712
  %1738 = vmatpush.bf16.msra.mxu0 %v1711
  %1739 = vmatpush.bf16.msra.mxu0 %v1710
  %1740 = vmatpush.bf16.msra.mxu0 %v1709
  %1741 = vmatpush.bf16.msra.mxu0 %v1708
  %1742 = vmatpush.bf16.msra.mxu0 %v1707
  %1743 = vmatpush.bf16.msra.mxu0 %v1706
  %1744 = vmatpush.bf16.msra.mxu0 %v1705
  %1745 = vmatmul.bf16.gmra.mxu0 %v1617
  %v1746 = vpop.f32.mrf.mxu0
  %v1747 = vpop.f32.mrf.mxu0
  %1748 = vmatmul.bf16.gmra.mxu0 %v1619
  %v1749 = vpop.f32.mrf.mxu0
  %v1750 = vpop.f32.mrf.mxu0
  %1751 = vmatmul.bf16.gmra.mxu0 %v1621
  %v1752 = vpop.f32.mrf.mxu0
  %v1753 = vpop.f32.mrf.mxu0
  %1754 = vmatmul.bf16.gmra.mxu0 %v1623
  %v1755 = vpop.f32.mrf.mxu0
  %v1756 = vpop.f32.mrf.mxu0
  %1757 = vmatmul.bf16.gmra.mxu0 %v1625
  %v1758 = vpop.f32.mrf.mxu0
  %v1759 = vpop.f32.mrf.mxu0
  %1760 = vmatmul.bf16.gmra.mxu0 %v1627
  %v1761 = vpop.f32.mrf.mxu0
  %v1762 = vadd.f32 %v1580, %v1761
  %v1763 = vpop.f32.mrf.mxu0
  %v1764 = vadd.f32 %v1580, %v1763
  %1765 = vdwg.mxu0
  %1766 = vmatpush.bf16.msra.mxu0 %v1720
  %1767 = vmatpush.bf16.msra.mxu0 %v1719
  %1768 = vmatpush.bf16.msra.mxu0 %v1718
  %1769 = vmatpush.bf16.msra.mxu0 %v1717
  %1770 = vmatpush.bf16.msra.mxu0 %v1716
  %1771 = vmatpush.bf16.msra.mxu0 %v1715
  %1772 = vmatpush.bf16.msra.mxu0 %v1714
  %1773 = vmatpush.bf16.msra.mxu0 %v1713
  %1774 = vmatmul.bf16.gmra.mxu0 %v1618
  %v1775 = vpop.f32.mrf.mxu0
  %v1776 = vpop.f32.mrf.mxu0
  %1777 = vmatmul.bf16.gmra.mxu0 %v1620
  %v1778 = vpop.f32.mrf.mxu0
  %v1779 = vpop.f32.mrf.mxu0
  %1780 = vmatmul.bf16.gmra.mxu0 %v1622
  %v1781 = vpop.f32.mrf.mxu0
  %v1782 = vpop.f32.mrf.mxu0
  %1783 = vmatmul.bf16.gmra.mxu0 %v1624
  %v1784 = vpop.f32.mrf.mxu0
  %v1785 = vpop.f32.mrf.mxu0
  %1786 = vmatmul.bf16.gmra.mxu0 %v1626
  %v1787 = vpop.f32.mrf.mxu0
  %v1788 = vpop.f32.mrf.mxu0
  %1789 = vmatmul.bf16.gmra.mxu0 %v1628
  %v1790 = vpop.f32.mrf.mxu0
  %v1791 = vadd.f32 %v1762, %v1790
  %v1792 = vpop.f32.mrf.mxu0
  %v1793 = vadd.f32 %v1764, %v1792
  %1794 = vdwg.mxu0
  %v1795 = vadd.f32 %v1791, %v1245
  %v1796 = vadd.f32 %v1793, %v1248
  %v1797 = vperm.slane %v52, 0
  %v1799 = vsel %vm192, %v1795, 0
  %v1802 = vsel %vm192, %v1796, 0
  %1804 = vmatpush.msra.mxu0 0.0
  %1805 = vmatpush.msra.mxu0 0.0
  %1806 = vmatpush.msra.mxu0 0.0
  %1807 = vmatpush.msra.mxu0 0.0
  %1808 = vmatpush.msra.mxu0 0.0
  %1809 = vmatpush.msra.mxu0 0.0
  %1810 = vmatpush.msra.mxu0 0.0
  %1811 = vmatpush.msra.mxu0 0.0
  %1812 = vmatpush.msra.mxu0 0.0
  %1813 = vmatpush.msra.mxu0 0.0
  %1814 = vmatpush.msra.mxu0 0.0
  %1815 = vmatpush.msra.mxu0 0.0
  %1816 = vmatpush.msra.mxu0 %v51
  %1817 = vmatpush.msra.mxu0 %v50
  %1818 = vmatpush.msra.mxu0 %v49
  %1819 = vmatpush.msra.mxu0 %v48
  %1820 = vmatmul.f32.gmra.mxu0 %v1799
  %v1821 = vpop.f32.mrf.mxu0
  %v1822 = vadd.f32 %v1797, %v1821
  %1823 = vmatmul.f32.gmra.mxu0 %v1802
  %v1824 = vpop.f32.mrf.mxu0
  %v1825 = vadd.f32 %v1797, %v1824
  %1826 = vdwg.mxu0
  %1827 = vst.msk [vmem:[%s6] sm:$0xff] %vm192, %v1822
  %1828 = vst.msk [vmem:[%s6 + $0x8] sm:$0xff] %vm192, %v1825
  // Predicated region
  $region26: #{diagonal_ssm_forward.1} parent=0 // pred_check
    _
  $region27: #{diagonal_ssm_forward.1} parent=0 // pred_check_branch
    %1830 = sbr.rel (0) target = $region29
  $region28: #{diagonal_ssm_forward.1} parent=0 // pred_region
    _
  $region29: #{diagonal_ssm_forward.1} parent=0 // pred_fallthru
    _
  // Predicated region
  $region30: #{diagonal_ssm_forward.1} parent=0 // pred_check
    _
  $region31: #{diagonal_ssm_forward.1} parent=0 // pred_check_branch
    %1832 = sbr.rel (0) target = $region33
  $region32: #{diagonal_ssm_forward.1} parent=0 // pred_region
    _
  $region33: #{diagonal_ssm_forward.1} parent=0 // pred_fallthru
    _

</llo_original>
